<compile_context>
chip_gen: v7x
topology: tpu7x:2x2x1
jax: 0.10.0
libtpu: 0.0.40
codegen_flags: <defaults>
</compile_context>

<pallas_src>
import jax
import jax.numpy as jnp
from jax.experimental import pallas as pl
from jax.experimental.pallas import tpu as pltpu

EPS = 1e-5                      # torch.nn.LayerNorm default eps
M_BUCKET = 64                   # bucket expanded length -> fewer recompiles
TM_MAX = 256                    # mel-frame tile (VMEM-budgeted for v7x too)
VMEM_LIMIT = 64 * 1024 * 1024   # raise scoped VMEM cap (default 16/32 MiB)


def _round_up(n, m):
    return ((n + m - 1) // m) * m


# ----------------------------- Pallas kernels ------------------------------ #

def _conv_ln_relu(x, w, b, gamma, beta):
    """'same' 1-D conv over time + LayerNorm + ReLU.

    x: (T, Din)   w: (K, Din, Dout)   b/gamma/beta: (1, Dout)
    Tap k reads x[t + k - pad]; realized as a sublane roll (XLU) with the
    out-of-range boundary rows masked to zero, then one MXU matmul per tap.
    """
    T, _ = x.shape
    K = w.shape[0]
    pad = (K - 1) // 2
    t_idx = jax.lax.broadcasted_iota(jnp.int32, (T, 1), 0)
    acc = jnp.zeros((T, w.shape[2]), jnp.float32)
    for k in range(K):
        shift = k - pad                                   # xk[t] = x[t + shift]
        if shift == 0:
            xk = x
        else:
            xk = pltpu.roll(x, (-shift) % T, axis=0)      # XLU rotate (cheap)
            valid = jnp.logical_and(t_idx + shift >= 0, t_idx + shift < T)
            xk = jnp.where(valid, xk, 0.0)                # zero 'same' padding
        acc = acc + jnp.dot(xk, w[k], preferred_element_type=jnp.float32)
    acc = acc + b
    mu = jnp.mean(acc, axis=-1, keepdims=True)
    var = jnp.mean((acc - mu) ** 2, axis=-1, keepdims=True)
    h = (acc - mu) * jax.lax.rsqrt(var + EPS)
    h = h * gamma + beta
    return jnp.maximum(h, 0.0)


def predictor_kernel(x_ref, w1_ref, b1_ref, g1_ref, be1_ref,
                     w2_ref, b2_ref, g2_ref, be2_ref,
                     wl_ref, bl_ref, out_ref):
    x = x_ref[0]                                                   # (T, D) f32
    h = _conv_ln_relu(x, w1_ref[...], b1_ref[...], g1_ref[...], be1_ref[...])
    h = _conv_ln_relu(h, w2_ref[...], b2_ref[...], g2_ref[...], be2_ref[...])
    # Linear(F -> 1) as broadcast-mul + lane reduce: avoids an N=1 MXU matmul
    # and keeps the (B, 1, T) output lane-dense (unmasked stores).
    d = jnp.sum(h * wl_ref[...], axis=-1) + bl_ref[0, 0]           # (T,)
    out_ref[...] = jnp.maximum(d, 0.0)[None, None, :]              # dropout = identity (eval)


def lr_kernel(starts_ref, ends_ref, x_ref, out_ref):
    tm = out_ref.shape[1]
    T = x_ref.shape[1]
    m0 = pl.program_id(1) * tm                     # first mel frame of this tile
    starts = starts_ref[0]                         # (1, T) int32
    ends = ends_ref[0]                             # (1, T) int32
    # Tile-local int32 frame indices; no (B, M, T) materialization, no f32 cast
    # before the compares.
    m_idx = jax.lax.broadcasted_iota(jnp.int32, (tm, T), 0) + m0
    mask = jnp.logical_and(m_idx >= starts, m_idx < ends)          # (tm, T)
    align = jnp.where(mask, 1.0, 0.0).astype(jnp.bfloat16)         # exact 0/1
    x_bf = x_ref[0].astype(jnp.bfloat16)                           # (T, D)
    out = jnp.dot(align, x_bf, preferred_element_type=jnp.float32)
    out_ref[0] = out.astype(out_ref.dtype)


# ------------------------------- wrappers ---------------------------------- #

def duration_predictor(x, p):
    B, T, D = x.shape
    K, _, F = p["w1"].shape
    wl_row = p["wl"].reshape(1, F)                 # lane-dense weight row

    def const(shape):                              # tiny weights: constant blocks
        return pl.BlockSpec(shape, lambda b, _s=shape: (0,) * len(_s))

    out = pl.pallas_call(
        predictor_kernel,
        out_shape=jax.ShapeDtypeStruct((B, 1, T), jnp.float32),
        grid_spec=pltpu.PrefetchScalarGridSpec(
            num_scalar_prefetch=0,
            grid=(B,),
            in_specs=[
                pl.BlockSpec((1, T, D), lambda b: (b, 0, 0)),
                const((K, D, F)), const((1, F)), const((1, F)), const((1, F)),
                const((K, F, F)), const((1, F)), const((1, F)), const((1, F)),
                const((1, F)), const((1, 1)),
            ],
            out_specs=pl.BlockSpec((1, 1, T), lambda b: (b, 0, 0)),
        ),
        compiler_params=pltpu.CompilerParams(
            dimension_semantics=("parallel",),     # batch across TCs on v7x
            vmem_limit_bytes=VMEM_LIMIT),
    )(x, p["w1"], p["b1"], p["g1"], p["be1"],
      p["w2"], p["b2"], p["g2"], p["be2"], wl_row, p["bl"])
    return out[:, 0, :]                            # (B, T)


def length_regulate(x, dur, out_len):
    """out[b, m] = x[b, t] for the unique t with starts[b,t] <= m < ends[b,t]."""
    B, T, D = x.shape
    dur = dur.astype(jnp.int32)
    ends = jnp.cumsum(dur, axis=-1)                # inclusive prefix sum (B, T)
    starts = ends - dur                            # exclusive prefix sum

    m_pad = _round_up(max(out_len, 1), M_BUCKET)   # bucket -> bounded recompiles
    if m_pad <= TM_MAX:
        tm = m_pad
    else:
        tm = TM_MAX
        m_pad = _round_up(m_pad, tm)

    out = pl.pallas_call(
        lr_kernel,
        out_shape=jax.ShapeDtypeStruct((B, m_pad, D), x.dtype),
        grid_spec=pltpu.PrefetchScalarGridSpec(
            num_scalar_prefetch=0,
            grid=(B, m_pad // tm),
            in_specs=[
                pl.BlockSpec((1, 1, T), lambda b, m: (b, 0, 0)),   # starts
                pl.BlockSpec((1, 1, T), lambda b, m: (b, 0, 0)),   # ends
                pl.BlockSpec((1, T, D), lambda b, m: (b, 0, 0)),   # x
            ],
            out_specs=pl.BlockSpec((1, tm, D), lambda b, m: (b, m, 0)),
        ),
        compiler_params=pltpu.CompilerParams(
            dimension_semantics=("parallel", "parallel"),
            vmem_limit_bytes=VMEM_LIMIT),
    )(starts[:, None, :], ends[:, None, :], x)
    return out[:, :out_len]


def length_regulator_forward(x, params, alpha=1.0):
    """Inference path of LengthRegulator.forward (target=None)."""
    d = duration_predictor(x, params)                        # (B, T), >= 0
    dur_f = jnp.maximum((jnp.exp(d) - 1.0) * alpha, 0.0)     # exp(.)-1, *alpha, relu
    dur = dur_f.astype(jnp.int32)                            # torch .long(): trunc (vals >= 0)
    # TODO(synk): data-dependent output length needs a host sync to size the
    # buffer (the reference drops to numpy too); use a static mel_max_length to
    # avoid it entirely in a fully jitted pipeline.
    expand_max_len = int(jax.device_get(jnp.max(jnp.sum(dur, axis=-1))))
    expand_max_len = max(expand_max_len, 1)                  # torch would return an empty tensor for 0
    out = length_regulate(x, dur, expand_max_len)            # (B, M, D)
    # torch uses int64 ("long"); int32 here since x64 is disabled by default.
    mel_pos = jnp.arange(1, out.shape[1] + 1, dtype=jnp.int32)[None, :]
    return out, mel_pos, dur


# ----------------------------- deterministic init --------------------------- #

def init_params(key, encoder_dim, filter_size, kernel_size):
    ks = jax.random.split(key, 3)
    D, Fs, K = encoder_dim, filter_size, kernel_size
    scale = 0.1
    return dict(
        w1=jax.random.normal(ks[0], (K, D, Fs), jnp.float32) * scale,
        b1=jnp.zeros((1, Fs), jnp.float32),
        g1=jnp.ones((1, Fs), jnp.float32),
        be1=jnp.zeros((1, Fs), jnp.float32),
        w2=jax.random.normal(ks[1], (K, Fs, Fs), jnp.float32) * scale,
        b2=jnp.zeros((1, Fs), jnp.float32),
        g2=jnp.ones((1, Fs), jnp.float32),
        be2=jnp.zeros((1, Fs), jnp.float32),
        wl=jax.random.normal(ks[2], (Fs, 1), jnp.float32) * scale,
        bl=jnp.full((1, 1), 1.0, jnp.float32),   # positive bias -> nonzero durations
    )


# ------------------------------ pure-JAX references ------------------------- #

def _ref_predictor(x, p):
    def conv_ln_relu(h, w, b, g, be):
        K = w.shape[0]; pad = (K - 1) // 2
        B, T, _ = h.shape
        hp = jnp.pad(h, ((0, 0), (pad, pad), (0, 0)))
        acc = sum(jnp.einsum("btd,df->btf", hp[:, k:k + T, :], w[k])
                  for k in range(K)) + b[0]
        mu = acc.mean(-1, keepdims=True)
        var = ((acc - mu) ** 2).mean(-1, keepdims=True)
        return jnp.maximum((acc - mu) / jnp.sqrt(var + EPS) * g[0] + be[0], 0.0)

    h = conv_ln_relu(x, p["w1"], p["b1"], p["g1"], p["be1"])
    h = conv_ln_relu(h, p["w2"], p["b2"], p["g2"], p["be2"])
    d = jnp.einsum("btf,fo->bto", h, p["wl"])[..., 0] + p["bl"][0, 0]
    return jnp.maximum(d, 0.0)


def _ref_lr(x, dur, M):
    ends = jnp.cumsum(dur, -1)
    starts = ends - dur
    m = jnp.arange(M, dtype=jnp.int32)[None, :, None]
    align = ((m >= starts[:, None, :]) & (m < ends[:, None, :])).astype(x.dtype)
    return jnp.einsum("bmt,btd->bmd", align, x)


# ----------------------------------- main ----------------------------------- #

if __name__ == "__main__":
    B, T, encoder_dim = 2, 8, 32
    filter_size, kernel_size, alpha, dropout = 32, 3, 1.0, 0.1  # dropout unused (eval)

    key = jax.random.PRNGKey(0)
    kx, kp = jax.random.split(key)
    x = jax.random.normal(kx, (B, T, encoder_dim), jnp.float32)
    params = init_params(kp, encoder_dim, filter_size, kernel_size)

    out, mel_pos, dur = length_regulator_forward(x, params, alpha=alpha)
    out = jax.block_until_ready(out)
    mel_pos = jax.block_until_ready(mel_pos)

    # --- lightweight correctness checks vs pure-JAX references -------------- #
    # Predictor math (f32 kernel vs f32 XLA reference; different summation order).
    d_ker = duration_predictor(x, params)
    d_ref = _ref_predictor(x, params)
    assert jnp.allclose(d_ker, d_ref, atol=1e-3, rtol=1e-3), "predictor mismatch"
    # LR expansion: reference alignment built from the kernel's integer
    # durations (x/align are fed to the MXU in bf16, hence the tolerance).
    ref_out = _ref_lr(x, dur, out.shape[1])
    assert out.shape == ref_out.shape, (out.shape, ref_out.shape)
    assert jnp.allclose(out, ref_out, atol=2e-2, rtol=2e-2), "LR output mismatch"
    assert mel_pos.shape == (1, out.shape[1])

    print("KERNEL_OK")
</pallas_src>

<mosaic_0001>
module attributes {stable_mosaic.version = 11 : i64} {
  func.func @predictor_kernel(%arg0: i32, %arg1: memref<1x8x32xf32, #tpu.memory_space<vmem>>, %arg2: memref<3x32x32xf32, #tpu.memory_space<vmem>>, %arg3: memref<1x32xf32, #tpu.memory_space<vmem>>, %arg4: memref<1x32xf32, #tpu.memory_space<vmem>>, %arg5: memref<1x32xf32, #tpu.memory_space<vmem>>, %arg6: memref<3x32x32xf32, #tpu.memory_space<vmem>>, %arg7: memref<1x32xf32, #tpu.memory_space<vmem>>, %arg8: memref<1x32xf32, #tpu.memory_space<vmem>>, %arg9: memref<1x32xf32, #tpu.memory_space<vmem>>, %arg10: memref<1x32xf32, #tpu.memory_space<vmem>>, %arg11: memref<1x1xf32, #tpu.memory_space<vmem>>, %arg12: memref<1x1x8xf32, #tpu.memory_space<vmem>>) attributes {dimension_semantics = [#tpu.dimension_semantics<parallel>], iteration_bounds = array<i64: 2>, scalar_prefetch = 0 : i64, scratch_operands = 0 : i64, tpu.core_type = #tpu.core_type<tc>, window_params = [{transform_indices = @transform_0, window_bounds = array<i64: 1, 8, 32>}, {pipeline_mode = #tpu.pipeline_mode<synchronous>, transform_indices = @transform_1, window_bounds = array<i64: 3, 32, 32>}, {pipeline_mode = #tpu.pipeline_mode<synchronous>, transform_indices = @transform_2, window_bounds = array<i64: 1, 32>}, {pipeline_mode = #tpu.pipeline_mode<synchronous>, transform_indices = @transform_3, window_bounds = array<i64: 1, 32>}, {pipeline_mode = #tpu.pipeline_mode<synchronous>, transform_indices = @transform_4, window_bounds = array<i64: 1, 32>}, {pipeline_mode = #tpu.pipeline_mode<synchronous>, transform_indices = @transform_5, window_bounds = array<i64: 3, 32, 32>}, {pipeline_mode = #tpu.pipeline_mode<synchronous>, transform_indices = @transform_6, window_bounds = array<i64: 1, 32>}, {pipeline_mode = #tpu.pipeline_mode<synchronous>, transform_indices = @transform_7, window_bounds = array<i64: 1, 32>}, {pipeline_mode = #tpu.pipeline_mode<synchronous>, transform_indices = @transform_8, window_bounds = array<i64: 1, 32>}, {pipeline_mode = #tpu.pipeline_mode<synchronous>, transform_indices = @transform_9, window_bounds = array<i64: 1, 32>}, {pipeline_mode = #tpu.pipeline_mode<synchronous>, transform_indices = @transform_10, window_bounds = array<i64: 1, 1>}, {transform_indices = @transform_11, window_bounds = array<i64: 1, 1, 8>}]} {
    %c0 = arith.constant 0 : index
    %c0_0 = arith.constant 0 : index
    %c0_1 = arith.constant 0 : index
    %0 = vector.load %arg1[%c0, %c0_0, %c0_1] : memref<1x8x32xf32, #tpu.memory_space<vmem>>, vector<1x8x32xf32>
    %1 = vector.shape_cast %0 : vector<1x8x32xf32> to vector<8x32xf32>
    %c0_2 = arith.constant 0 : index
    %c0_3 = arith.constant 0 : index
    %c0_4 = arith.constant 0 : index
    %2 = vector.load %arg2[%c0_2, %c0_3, %c0_4] : memref<3x32x32xf32, #tpu.memory_space<vmem>>, vector<3x32x32xf32>
    %c0_5 = arith.constant 0 : index
    %c0_6 = arith.constant 0 : index
    %3 = vector.load %arg3[%c0_5, %c0_6] : memref<1x32xf32, #tpu.memory_space<vmem>>, vector<1x32xf32>
    %c0_7 = arith.constant 0 : index
    %c0_8 = arith.constant 0 : index
    %4 = vector.load %arg4[%c0_7, %c0_8] : memref<1x32xf32, #tpu.memory_space<vmem>>, vector<1x32xf32>
    %c0_9 = arith.constant 0 : index
    %c0_10 = arith.constant 0 : index
    %5 = vector.load %arg5[%c0_9, %c0_10] : memref<1x32xf32, #tpu.memory_space<vmem>>, vector<1x32xf32>
    %6 = tpu.iota {dimensions = array<i32: 0>} : vector<8x1xi32>
    %cst = arith.constant 0.000000e+00 : f32
    %7 = vector.broadcast %cst : f32 to vector<8x32xf32>
    %c1_i32 = arith.constant 1 : i32
    %8 = tpu.dynamic_rotate %1 by %c1_i32 dim 0 : vector<8x32xf32>, i32 -> vector<8x32xf32>
    %c-1_i32 = arith.constant -1 : i32
    %9 = vector.broadcast %c-1_i32 : i32 to vector<8x1xi32>
    %10 = arith.addi %6, %9 : vector<8x1xi32>
    %c0_i32 = arith.constant 0 : i32
    %11 = vector.broadcast %c0_i32 : i32 to vector<8x1xi32>
    %12 = arith.cmpi sge, %10, %11 : vector<8x1xi32>
    %c-1_i32_11 = arith.constant -1 : i32
    %13 = vector.broadcast %c-1_i32_11 : i32 to vector<8x1xi32>
    %14 = arith.addi %6, %13 : vector<8x1xi32>
    %c8_i32 = arith.constant 8 : i32
    %15 = vector.broadcast %c8_i32 : i32 to vector<8x1xi32>
    %16 = arith.cmpi slt, %14, %15 : vector<8x1xi32>
    %17 = arith.andi %12, %16 : vector<8x1xi1>
    %cst_12 = arith.constant 0.000000e+00 : f32
    %18 = vector.shape_cast %17 : vector<8x1xi1> to vector<8x1xi1>
    %19 = vector.broadcast %18 : vector<8x1xi1> to vector<8x32xi1>
    %20 = vector.broadcast %cst_12 : f32 to vector<8x32xf32>
    %21 = arith.select %19, %8, %20 : vector<8x32xi1>, vector<8x32xf32>
    %22 = vector.extract_strided_slice %2 {offsets = [0, 0, 0], sizes = [1, 32, 32], strides = [1, 1, 1]} : vector<3x32x32xf32> to vector<1x32x32xf32>
    %23 = vector.shape_cast %22 : vector<1x32x32xf32> to vector<32x32xf32>
    %cst_13 = arith.constant dense<0.000000e+00> : vector<8x32xf32>
    %24 = tpu.matmul %21, %23, %cst_13 {dimension_numbers = #tpu.dot_dimension_numbers<[1], [0], [0], [1], [0, 0, 1, 1], [], []>} : vector<8x32xf32>, vector<32x32xf32>, vector<8x32xf32> -> vector<8x32xf32>
    %25 = arith.addf %7, %24 : vector<8x32xf32>
    %26 = vector.extract_strided_slice %2 {offsets = [1, 0, 0], sizes = [1, 32, 32], strides = [1, 1, 1]} : vector<3x32x32xf32> to vector<1x32x32xf32>
    %27 = vector.shape_cast %26 : vector<1x32x32xf32> to vector<32x32xf32>
    %cst_14 = arith.constant dense<0.000000e+00> : vector<8x32xf32>
    %28 = tpu.matmul %1, %27, %cst_14 {dimension_numbers = #tpu.dot_dimension_numbers<[1], [0], [0], [1], [0, 0, 1, 1], [], []>} : vector<8x32xf32>, vector<32x32xf32>, vector<8x32xf32> -> vector<8x32xf32>
    %29 = arith.addf %25, %28 : vector<8x32xf32>
    %c7_i32 = arith.constant 7 : i32
    %30 = tpu.dynamic_rotate %1 by %c7_i32 dim 0 : vector<8x32xf32>, i32 -> vector<8x32xf32>
    %c1_i32_15 = arith.constant 1 : i32
    %31 = vector.broadcast %c1_i32_15 : i32 to vector<8x1xi32>
    %32 = arith.addi %6, %31 : vector<8x1xi32>
    %c0_i32_16 = arith.constant 0 : i32
    %33 = vector.broadcast %c0_i32_16 : i32 to vector<8x1xi32>
    %34 = arith.cmpi sge, %32, %33 : vector<8x1xi32>
    %c1_i32_17 = arith.constant 1 : i32
    %35 = vector.broadcast %c1_i32_17 : i32 to vector<8x1xi32>
    %36 = arith.addi %6, %35 : vector<8x1xi32>
    %c8_i32_18 = arith.constant 8 : i32
    %37 = vector.broadcast %c8_i32_18 : i32 to vector<8x1xi32>
    %38 = arith.cmpi slt, %36, %37 : vector<8x1xi32>
    %39 = arith.andi %34, %38 : vector<8x1xi1>
    %cst_19 = arith.constant 0.000000e+00 : f32
    %40 = vector.shape_cast %39 : vector<8x1xi1> to vector<8x1xi1>
    %41 = vector.broadcast %40 : vector<8x1xi1> to vector<8x32xi1>
    %42 = vector.broadcast %cst_19 : f32 to vector<8x32xf32>
    %43 = arith.select %41, %30, %42 : vector<8x32xi1>, vector<8x32xf32>
    %44 = vector.extract_strided_slice %2 {offsets = [2, 0, 0], sizes = [1, 32, 32], strides = [1, 1, 1]} : vector<3x32x32xf32> to vector<1x32x32xf32>
    %45 = vector.shape_cast %44 : vector<1x32x32xf32> to vector<32x32xf32>
    %cst_20 = arith.constant dense<0.000000e+00> : vector<8x32xf32>
    %46 = tpu.matmul %43, %45, %cst_20 {dimension_numbers = #tpu.dot_dimension_numbers<[1], [0], [0], [1], [0, 0, 1, 1], [], []>} : vector<8x32xf32>, vector<32x32xf32>, vector<8x32xf32> -> vector<8x32xf32>
    %47 = arith.addf %29, %46 : vector<8x32xf32>
    %48 = vector.broadcast %3 : vector<1x32xf32> to vector<8x32xf32>
    %49 = arith.addf %47, %48 : vector<8x32xf32>
    %cst_21 = arith.constant dense<0.000000e+00> : vector<8xf32>
    %50 = vector.multi_reduction <add>, %49, %cst_21 [1] : vector<8x32xf32> to vector<8xf32>
    %51 = vector.shape_cast %50 : vector<8xf32> to vector<8x1xf32>
    %cst_22 = arith.constant 3.200000e+01 : f32
    %52 = vector.broadcast %cst_22 : f32 to vector<8x1xf32>
    %53 = arith.divf %51, %52 : vector<8x1xf32>
    %54 = vector.broadcast %53 : vector<8x1xf32> to vector<8x32xf32>
    %55 = arith.subf %49, %54 : vector<8x32xf32>
    %56 = arith.mulf %55, %55 : vector<8x32xf32>
    %cst_23 = arith.constant dense<0.000000e+00> : vector<8xf32>
    %57 = vector.multi_reduction <add>, %56, %cst_23 [1] : vector<8x32xf32> to vector<8xf32>
    %58 = vector.shape_cast %57 : vector<8xf32> to vector<8x1xf32>
    %cst_24 = arith.constant 3.200000e+01 : f32
    %59 = vector.broadcast %cst_24 : f32 to vector<8x1xf32>
    %60 = arith.divf %58, %59 : vector<8x1xf32>
    %61 = vector.broadcast %53 : vector<8x1xf32> to vector<8x32xf32>
    %62 = arith.subf %49, %61 : vector<8x32xf32>
    %cst_25 = arith.constant 9.99999974E-6 : f32
    %63 = vector.broadcast %cst_25 : f32 to vector<8x1xf32>
    %64 = arith.addf %60, %63 : vector<8x1xf32>
    %65 = math.rsqrt %64 : vector<8x1xf32>
    %66 = vector.broadcast %65 : vector<8x1xf32> to vector<8x32xf32>
    %67 = arith.mulf %62, %66 : vector<8x32xf32>
    %68 = vector.broadcast %4 : vector<1x32xf32> to vector<8x32xf32>
    %69 = arith.mulf %67, %68 : vector<8x32xf32>
    %70 = vector.broadcast %5 : vector<1x32xf32> to vector<8x32xf32>
    %71 = arith.addf %69, %70 : vector<8x32xf32>
    %cst_26 = arith.constant 0.000000e+00 : f32
    %72 = vector.broadcast %cst_26 : f32 to vector<8x32xf32>
    %73 = arith.maximumf %71, %72 : vector<8x32xf32>
    %c0_27 = arith.constant 0 : index
    %c0_28 = arith.constant 0 : index
    %c0_29 = arith.constant 0 : index
    %74 = vector.load %arg6[%c0_27, %c0_28, %c0_29] : memref<3x32x32xf32, #tpu.memory_space<vmem>>, vector<3x32x32xf32>
    %c0_30 = arith.constant 0 : index
    %c0_31 = arith.constant 0 : index
    %75 = vector.load %arg7[%c0_30, %c0_31] : memref<1x32xf32, #tpu.memory_space<vmem>>, vector<1x32xf32>
    %c0_32 = arith.constant 0 : index
    %c0_33 = arith.constant 0 : index
    %76 = vector.load %arg8[%c0_32, %c0_33] : memref<1x32xf32, #tpu.memory_space<vmem>>, vector<1x32xf32>
    %c0_34 = arith.constant 0 : index
    %c0_35 = arith.constant 0 : index
    %77 = vector.load %arg9[%c0_34, %c0_35] : memref<1x32xf32, #tpu.memory_space<vmem>>, vector<1x32xf32>
    %78 = tpu.iota {dimensions = array<i32: 0>} : vector<8x1xi32>
    %cst_36 = arith.constant 0.000000e+00 : f32
    %79 = vector.broadcast %cst_36 : f32 to vector<8x32xf32>
    %c1_i32_37 = arith.constant 1 : i32
    %80 = tpu.dynamic_rotate %73 by %c1_i32_37 dim 0 : vector<8x32xf32>, i32 -> vector<8x32xf32>
    %c-1_i32_38 = arith.constant -1 : i32
    %81 = vector.broadcast %c-1_i32_38 : i32 to vector<8x1xi32>
    %82 = arith.addi %78, %81 : vector<8x1xi32>
    %c0_i32_39 = arith.constant 0 : i32
    %83 = vector.broadcast %c0_i32_39 : i32 to vector<8x1xi32>
    %84 = arith.cmpi sge, %82, %83 : vector<8x1xi32>
    %c-1_i32_40 = arith.constant -1 : i32
    %85 = vector.broadcast %c-1_i32_40 : i32 to vector<8x1xi32>
    %86 = arith.addi %78, %85 : vector<8x1xi32>
    %c8_i32_41 = arith.constant 8 : i32
    %87 = vector.broadcast %c8_i32_41 : i32 to vector<8x1xi32>
    %88 = arith.cmpi slt, %86, %87 : vector<8x1xi32>
    %89 = arith.andi %84, %88 : vector<8x1xi1>
    %cst_42 = arith.constant 0.000000e+00 : f32
    %90 = vector.shape_cast %89 : vector<8x1xi1> to vector<8x1xi1>
    %91 = vector.broadcast %90 : vector<8x1xi1> to vector<8x32xi1>
    %92 = vector.broadcast %cst_42 : f32 to vector<8x32xf32>
    %93 = arith.select %91, %80, %92 : vector<8x32xi1>, vector<8x32xf32>
    %94 = vector.extract_strided_slice %74 {offsets = [0, 0, 0], sizes = [1, 32, 32], strides = [1, 1, 1]} : vector<3x32x32xf32> to vector<1x32x32xf32>
    %95 = vector.shape_cast %94 : vector<1x32x32xf32> to vector<32x32xf32>
    %cst_43 = arith.constant dense<0.000000e+00> : vector<8x32xf32>
    %96 = tpu.matmul %93, %95, %cst_43 {dimension_numbers = #tpu.dot_dimension_numbers<[1], [0], [0], [1], [0, 0, 1, 1], [], []>} : vector<8x32xf32>, vector<32x32xf32>, vector<8x32xf32> -> vector<8x32xf32>
    %97 = arith.addf %79, %96 : vector<8x32xf32>
    %98 = vector.extract_strided_slice %74 {offsets = [1, 0, 0], sizes = [1, 32, 32], strides = [1, 1, 1]} : vector<3x32x32xf32> to vector<1x32x32xf32>
    %99 = vector.shape_cast %98 : vector<1x32x32xf32> to vector<32x32xf32>
    %cst_44 = arith.constant dense<0.000000e+00> : vector<8x32xf32>
    %100 = tpu.matmul %73, %99, %cst_44 {dimension_numbers = #tpu.dot_dimension_numbers<[1], [0], [0], [1], [0, 0, 1, 1], [], []>} : vector<8x32xf32>, vector<32x32xf32>, vector<8x32xf32> -> vector<8x32xf32>
    %101 = arith.addf %97, %100 : vector<8x32xf32>
    %c7_i32_45 = arith.constant 7 : i32
    %102 = tpu.dynamic_rotate %73 by %c7_i32_45 dim 0 : vector<8x32xf32>, i32 -> vector<8x32xf32>
    %c1_i32_46 = arith.constant 1 : i32
    %103 = vector.broadcast %c1_i32_46 : i32 to vector<8x1xi32>
    %104 = arith.addi %78, %103 : vector<8x1xi32>
    %c0_i32_47 = arith.constant 0 : i32
    %105 = vector.broadcast %c0_i32_47 : i32 to vector<8x1xi32>
    %106 = arith.cmpi sge, %104, %105 : vector<8x1xi32>
    %c1_i32_48 = arith.constant 1 : i32
    %107 = vector.broadcast %c1_i32_48 : i32 to vector<8x1xi32>
    %108 = arith.addi %78, %107 : vector<8x1xi32>
    %c8_i32_49 = arith.constant 8 : i32
    %109 = vector.broadcast %c8_i32_49 : i32 to vector<8x1xi32>
    %110 = arith.cmpi slt, %108, %109 : vector<8x1xi32>
    %111 = arith.andi %106, %110 : vector<8x1xi1>
    %cst_50 = arith.constant 0.000000e+00 : f32
    %112 = vector.shape_cast %111 : vector<8x1xi1> to vector<8x1xi1>
    %113 = vector.broadcast %112 : vector<8x1xi1> to vector<8x32xi1>
    %114 = vector.broadcast %cst_50 : f32 to vector<8x32xf32>
    %115 = arith.select %113, %102, %114 : vector<8x32xi1>, vector<8x32xf32>
    %116 = vector.extract_strided_slice %74 {offsets = [2, 0, 0], sizes = [1, 32, 32], strides = [1, 1, 1]} : vector<3x32x32xf32> to vector<1x32x32xf32>
    %117 = vector.shape_cast %116 : vector<1x32x32xf32> to vector<32x32xf32>
    %cst_51 = arith.constant dense<0.000000e+00> : vector<8x32xf32>
    %118 = tpu.matmul %115, %117, %cst_51 {dimension_numbers = #tpu.dot_dimension_numbers<[1], [0], [0], [1], [0, 0, 1, 1], [], []>} : vector<8x32xf32>, vector<32x32xf32>, vector<8x32xf32> -> vector<8x32xf32>
    %119 = arith.addf %101, %118 : vector<8x32xf32>
    %120 = vector.broadcast %75 : vector<1x32xf32> to vector<8x32xf32>
    %121 = arith.addf %119, %120 : vector<8x32xf32>
    %cst_52 = arith.constant dense<0.000000e+00> : vector<8xf32>
    %122 = vector.multi_reduction <add>, %121, %cst_52 [1] : vector<8x32xf32> to vector<8xf32>
    %123 = vector.shape_cast %122 : vector<8xf32> to vector<8x1xf32>
    %cst_53 = arith.constant 3.200000e+01 : f32
    %124 = vector.broadcast %cst_53 : f32 to vector<8x1xf32>
    %125 = arith.divf %123, %124 : vector<8x1xf32>
    %126 = vector.broadcast %125 : vector<8x1xf32> to vector<8x32xf32>
    %127 = arith.subf %121, %126 : vector<8x32xf32>
    %128 = arith.mulf %127, %127 : vector<8x32xf32>
    %cst_54 = arith.constant dense<0.000000e+00> : vector<8xf32>
    %129 = vector.multi_reduction <add>, %128, %cst_54 [1] : vector<8x32xf32> to vector<8xf32>
    %130 = vector.shape_cast %129 : vector<8xf32> to vector<8x1xf32>
    %cst_55 = arith.constant 3.200000e+01 : f32
    %131 = vector.broadcast %cst_55 : f32 to vector<8x1xf32>
    %132 = arith.divf %130, %131 : vector<8x1xf32>
    %133 = vector.broadcast %125 : vector<8x1xf32> to vector<8x32xf32>
    %134 = arith.subf %121, %133 : vector<8x32xf32>
    %cst_56 = arith.constant 9.99999974E-6 : f32
    %135 = vector.broadcast %cst_56 : f32 to vector<8x1xf32>
    %136 = arith.addf %132, %135 : vector<8x1xf32>
    %137 = math.rsqrt %136 : vector<8x1xf32>
    %138 = vector.broadcast %137 : vector<8x1xf32> to vector<8x32xf32>
    %139 = arith.mulf %134, %138 : vector<8x32xf32>
    %140 = vector.broadcast %76 : vector<1x32xf32> to vector<8x32xf32>
    %141 = arith.mulf %139, %140 : vector<8x32xf32>
    %142 = vector.broadcast %77 : vector<1x32xf32> to vector<8x32xf32>
    %143 = arith.addf %141, %142 : vector<8x32xf32>
    %cst_57 = arith.constant 0.000000e+00 : f32
    %144 = vector.broadcast %cst_57 : f32 to vector<8x32xf32>
    %145 = arith.maximumf %143, %144 : vector<8x32xf32>
    %c0_58 = arith.constant 0 : index
    %c0_59 = arith.constant 0 : index
    %146 = vector.load %arg10[%c0_58, %c0_59] : memref<1x32xf32, #tpu.memory_space<vmem>>, vector<1x32xf32>
    %147 = vector.broadcast %146 : vector<1x32xf32> to vector<8x32xf32>
    %148 = arith.mulf %145, %147 : vector<8x32xf32>
    %cst_60 = arith.constant dense<0.000000e+00> : vector<8xf32>
    %149 = vector.multi_reduction <add>, %148, %cst_60 [1] : vector<8x32xf32> to vector<8xf32>
    %c0_61 = arith.constant 0 : index
    %c0_62 = arith.constant 0 : index
    %150 = vector.load %arg11[%c0_61, %c0_62] : memref<1x1xf32, #tpu.memory_space<vmem>>, vector<1x1xf32>
    %151 = vector.extract %150[0, 0] : f32 from vector<1x1xf32>
    %152 = vector.broadcast %151 : f32 to vector<8xf32>
    %153 = arith.addf %149, %152 : vector<8xf32>
    %cst_63 = arith.constant 0.000000e+00 : f32
    %154 = vector.broadcast %cst_63 : f32 to vector<8xf32>
    %155 = arith.maximumf %153, %154 : vector<8xf32>
    %156 = vector.shape_cast %155 : vector<8xf32> to vector<1x1x8xf32>
    %c0_64 = arith.constant 0 : index
    %c0_65 = arith.constant 0 : index
    %c0_66 = arith.constant 0 : index
    %157 = vector.load %arg12[%c0_64, %c0_65, %c0_66] : memref<1x1x8xf32, #tpu.memory_space<vmem>>, vector<1x1x8xf32>
    tpu.vector_store %arg12[%c0_64, %c0_65, %c0_66], %156 {strides = array<i32>} : memref<1x1x8xf32, #tpu.memory_space<vmem>>, vector<1x1x8xf32>,
    return
  }
  func.func @transform_0(%arg0: i32) -> (i32, i32, i32) {
    %c0_i32 = arith.constant 0 : i32
    %c0_i32_0 = arith.constant 0 : i32
    %c0_i32_1 = arith.constant 0 : i32
    return %arg0, %c0_i32, %c0_i32_0 : i32, i32, i32
  }
  func.func @transform_1(%arg0: i32) -> (i32, i32, i32) {
    %c0_i32 = arith.constant 0 : i32
    %c0_i32_0 = arith.constant 0 : i32
    %c0_i32_1 = arith.constant 0 : i32
    %c0_i32_2 = arith.constant 0 : i32
    return %c0_i32, %c0_i32_0, %c0_i32_1 : i32, i32, i32
  }
  func.func @transform_2(%arg0: i32) -> (i32, i32) {
    %c0_i32 = arith.constant 0 : i32
    %c0_i32_0 = arith.constant 0 : i32
    %c0_i32_1 = arith.constant 0 : i32
    return %c0_i32, %c0_i32_0 : i32, i32
  }
  func.func @transform_3(%arg0: i32) -> (i32, i32) {
    %c0_i32 = arith.constant 0 : i32
    %c0_i32_0 = arith.constant 0 : i32
    %c0_i32_1 = arith.constant 0 : i32
    return %c0_i32, %c0_i32_0 : i32, i32
  }
  func.func @transform_4(%arg0: i32) -> (i32, i32) {
    %c0_i32 = arith.constant 0 : i32
    %c0_i32_0 = arith.constant 0 : i32
    %c0_i32_1 = arith.constant 0 : i32
    return %c0_i32, %c0_i32_0 : i32, i32
  }
  func.func @transform_5(%arg0: i32) -> (i32, i32, i32) {
    %c0_i32 = arith.constant 0 : i32
    %c0_i32_0 = arith.constant 0 : i32
    %c0_i32_1 = arith.constant 0 : i32
    %c0_i32_2 = arith.constant 0 : i32
    return %c0_i32, %c0_i32_0, %c0_i32_1 : i32, i32, i32
  }
  func.func @transform_6(%arg0: i32) -> (i32, i32) {
    %c0_i32 = arith.constant 0 : i32
    %c0_i32_0 = arith.constant 0 : i32
    %c0_i32_1 = arith.constant 0 : i32
    return %c0_i32, %c0_i32_0 : i32, i32
  }
  func.func @transform_7(%arg0: i32) -> (i32, i32) {
    %c0_i32 = arith.constant 0 : i32
    %c0_i32_0 = arith.constant 0 : i32
    %c0_i32_1 = arith.constant 0 : i32
    return %c0_i32, %c0_i32_0 : i32, i32
  }
  func.func @transform_8(%arg0: i32) -> (i32, i32) {
    %c0_i32 = arith.constant 0 : i32
    %c0_i32_0 = arith.constant 0 : i32
    %c0_i32_1 = arith.constant 0 : i32
    return %c0_i32, %c0_i32_0 : i32, i32
  }
  func.func @transform_9(%arg0: i32) -> (i32, i32) {
    %c0_i32 = arith.constant 0 : i32
    %c0_i32_0 = arith.constant 0 : i32
    %c0_i32_1 = arith.constant 0 : i32
    return %c0_i32, %c0_i32_0 : i32, i32
  }
  func.func @transform_10(%arg0: i32) -> (i32, i32) {
    %c0_i32 = arith.constant 0 : i32
    %c0_i32_0 = arith.constant 0 : i32
    %c0_i32_1 = arith.constant 0 : i32
    return %c0_i32, %c0_i32_0 : i32, i32
  }
  func.func @transform_11(%arg0: i32) -> (i32, i32, i32) {
    %c0_i32 = arith.constant 0 : i32
    %c0_i32_0 = arith.constant 0 : i32
    %c0_i32_1 = arith.constant 0 : i32
    return %arg0, %c0_i32, %c0_i32_0 : i32, i32, i32
  }
}

</mosaic_0001>

<llo_original>
// kernel: tpu_custom_call.1
$region0: #{tpu_custom_call.1}
  #allocation0 [shape = 'u32[]', space=smem, size = 0x4, offset = 0x4, fixed_abs, tag = 'smem constant byte address 0x4 - core index']
  #allocation1 [shape = 'u32[144,128]{1,0:T(1,128)}', space=vmem, size = 0x12000, scoped, tag = 'internal scratch']
  #allocation2 [shape = 'f32[1,1]{1,0:T(1,128)S(1)}', space=vmem, size = 0x200, scoped, tag = 'scoped memory for tpu_custom_call.1']
  %s0 = inlined_call_operand.hbm [shape: f32[2,8,32], index: 0, kind: input, shape index: {}]
  %s1 = inlined_call_operand.hbm [shape: f32[3,32,32], index: 1, kind: input, shape index: {}]
  %s2 = inlined_call_operand.hbm [shape: f32[1,32], index: 2, kind: input, shape index: {}]
  %s3 = inlined_call_operand.hbm [shape: f32[1,32], index: 3, kind: input, shape index: {}]
  %s4 = inlined_call_operand.hbm [shape: f32[1,32], index: 4, kind: input, shape index: {}]
  %s5 = inlined_call_operand.hbm [shape: f32[3,32,32], index: 5, kind: input, shape index: {}]
  %s6 = inlined_call_operand.hbm [shape: f32[1,32], index: 6, kind: input, shape index: {}]
  %s7 = inlined_call_operand.hbm [shape: f32[1,32], index: 7, kind: input, shape index: {}]
  %s8 = inlined_call_operand.hbm [shape: f32[1,32], index: 8, kind: input, shape index: {}]
  %s9 = inlined_call_operand.hbm [shape: f32[1,32], index: 9, kind: input, shape index: {}]
  %s10 = inlined_call_operand.<no memory space> [shape: f32[1,1], index: 10, kind: input, shape index: {}]
  %s11 = inlined_call_operand.hbm [shape: f32[2,1,8], index: 11, kind: output, shape index: {}]
  %s12 = sld [smem:[#allocation0]]
  $region117: #{tpu_custom_call.1} parent=0
    _
  %s14 = ssub.s32 1, %s12
  %s15 = scalar_select 0, %s14, %s12
  %v16 = vstv %s10
  %17 = vst [vmem:[#allocation2] sm:$0x1] %v16
  $region1: #{tpu_custom_call.1} parent=0
    #allocation3 [shape = 'u8[8192]{0}', space=vmem, size = 0x2000, scoped, tag = 'input window, operand 0']
    #allocation4 [shape = 's32[2]{0}', space=sflag, size = 0x8, scoped, tag = 'scoped memory for tpu_custom_call.1']
    #allocation5 [shape = 's32[2]{0}', space=sflag, size = 0x8, scoped, tag = 'scoped memory for tpu_custom_call.1']
    #allocation6 [shape = 'u8[49152]{0}', space=vmem, size = 0xc000, scoped, tag = 'input window, operand 1, single buffered']
    #allocation7 [shape = 's32[1]{0}', space=sflag, size = 0x4, scoped, tag = 'scoped memory for tpu_custom_call.1']
    #allocation8 [shape = 'u8[512]{0}', space=vmem, size = 0x400, scoped, tag = 'input window, operand 2, single buffered']
    #allocation9 [shape = 'u8[512]{0}', space=vmem, size = 0x400, scoped, tag = 'input window, operand 3, single buffered']
    #allocation10 [shape = 's32[1]{0}', space=sflag, size = 0x4, scoped, tag = 'scoped memory for tpu_custom_call.1']
    #allocation11 [shape = 'u8[512]{0}', space=vmem, size = 0x400, scoped, tag = 'input window, operand 4, single buffered']
    #allocation12 [shape = 'u8[49152]{0}', space=vmem, size = 0xc000, scoped, tag = 'input window, operand 5, single buffered']
    #allocation13 [shape = 's32[1]{0}', space=sflag, size = 0x4, scoped, tag = 'scoped memory for tpu_custom_call.1']
    #allocation14 [shape = 'u8[512]{0}', space=vmem, size = 0x400, scoped, tag = 'input window, operand 6, single buffered']
    #allocation15 [shape = 'u8[512]{0}', space=vmem, size = 0x400, scoped, tag = 'input window, operand 7, single buffered']
    #allocation16 [shape = 's32[1]{0}', space=sflag, size = 0x4, scoped, tag = 'scoped memory for tpu_custom_call.1']
    #allocation17 [shape = 'u8[512]{0}', space=vmem, size = 0x400, scoped, tag = 'input window, operand 8, single buffered']
    #allocation18 [shape = 'u8[512]{0}', space=vmem, size = 0x400, scoped, tag = 'input window, operand 9, single buffered']
    #allocation19 [shape = 's32[1]{0}', space=sflag, size = 0x4, scoped, tag = 'scoped memory for tpu_custom_call.1']
    #allocation20 [shape = 'u8[1024]{0}', space=vmem, size = 0x400, scoped, tag = 'output window, operand 0']
    %18 = vsyncpa [#allocation4], 0
    %s19 = scalar_lea.sflag [#allocation4], 1
    %20 = vsyncpa %s19, 0
    %21 = vsyncpa [#allocation7], 0
    %22 = vsyncpa [#allocation10], 0
    %23 = vsyncpa [#allocation13], 0
    %24 = vsyncpa [#allocation16], 0
    %25 = vsyncpa [#allocation19], 0
    %26 = vsyncpa [#allocation5], 0
    %s27 = scalar_lea.sflag [#allocation5], 1
    %28 = vsyncpa %s27, 0
    loop: start=0, step=1, limit=4
    $region2: #{tpu_custom_call.1} parent=1 // loop_pre_header
      _
    $region3: #{tpu_custom_call.1} parent=1 // loop_header
      %s30 = sphi 0, %s34
      %p31 = scmp.ge.s32.totalorder %s30, 4
      %s40 = sphi 0, %s42
      %s43 = sphi 0, %s40
      %s44 = sphi 0, %s43
      %s60 = sphi 0, %s44
      %s64 = sphi 0, %s64
      %s66 = sphi 0, %s64
      %s67 = sphi 0, %s66
      %s81 = sphi 0, %s67
      %s85 = sphi 0, %s85
      %s87 = sphi 0, %s85
      %s88 = sphi 0, %s87
      %s102 = sphi 0, %s88
      %s106 = sphi 0, %s106
      %s108 = sphi 0, %s106
      %s109 = sphi 0, %s108
      %s123 = sphi 0, %s109
      %s127 = sphi 0, %s127
      %s129 = sphi 0, %s127
      %s130 = sphi 0, %s129
      %s144 = sphi 0, %s130
      %s148 = sphi 0, %s148
      %s150 = sphi 0, %s148
      %s151 = sphi 0, %s150
      %s165 = sphi 0, %s151
      %s169 = sphi 0, %s169
      %s171 = sphi 0, %s169
      %s172 = sphi 0, %s171
      %s186 = sphi 0, %s172
      %s190 = sphi 0, %s190
      %s192 = sphi 0, %s190
      %s193 = sphi 0, %s192
      %s207 = sphi 0, %s193
      %s211 = sphi 0, %s211
      %s213 = sphi 0, %s211
      %s214 = sphi 0, %s213
      %s228 = sphi 0, %s214
      %s232 = sphi 0, %s232
      %s234 = sphi 0, %s232
      %s235 = sphi 0, %s234
      %s249 = sphi 0, %s235
      %s253 = sphi 0, %s253
      %s255 = sphi 0, %s253
      %s256 = sphi 0, %s255
      %s270 = sphi 0, %s256
      %s276 = sphi 0, %s278
      %s279 = sphi 0, %s276
      %s280 = sphi 0, %s279
      %s296 = sphi 0, %s280
    $region4: #{tpu_custom_call.1} parent=1 // loop_header_branch
      %33 = sbr.rel (%p31) target = $region8
    $region5: #{tpu_custom_call.1} parent=1 // loop_body
      %s35 = ssub.s32 %s30, 1
      %s36 = ssub.s32 %s30, 2
      %s37 = sadd.s32 %s30, 1
      %s38 = ssub.s32 %s30, %s37
      %p39 = scmp.eq.s32.totalorder %s38, 0
      %s41 = sadd.s32 %s40, 1
      %s42 = scalar_select %p39, %s40, %s41
      %p45 = pneg %p39
      %p46 = scmp.eq.s32.totalorder %s30, 1
      %p47 = por %p45, %p46
      %p48 = scmp.ne.s32.totalorder %s40, %s43
      %p49 = scmp.eq.s32.totalorder %s30, 0
      %p50 = por %p48, %p49
      %p51 = scmp.ne.s32.totalorder %s40, %s43
      %p52 = scmp.eq.s32.totalorder %s35, 1
      %p53 = por %p51, %p52
      %p54 = scmp.ne.s32.totalorder %s43, %s44
      %p55 = scmp.eq.s32.totalorder %s35, 0
      %p56 = por %p54, %p55
      %p57 = scmp.ne.s32.totalorder %s43, %s44
      %p58 = scmp.eq.s32.totalorder %s36, 1
      %p59 = por %p57, %p58
      %p61 = scmp.ne.s32.totalorder %s44, %s60
      %p62 = scmp.eq.s32.totalorder %s36, 0
      %p63 = por %p61, %p62
      %s65 = sadd.s32 %s64, 1
      %p68 = scmp.eq.s32.totalorder %s30, 1
      %p69 = scmp.ne.s32.totalorder %s64, %s66
      %p70 = scmp.eq.s32.totalorder %s30, 0
      %p71 = por %p69, %p70
      %p72 = scmp.ne.s32.totalorder %s64, %s66
      %p73 = scmp.eq.s32.totalorder %s35, 1
      %p74 = por %p72, %p73
      %p75 = scmp.ne.s32.totalorder %s66, %s67
      %p76 = scmp.eq.s32.totalorder %s35, 0
      %p77 = por %p75, %p76
      %p78 = scmp.ne.s32.totalorder %s66, %s67
      %p79 = scmp.eq.s32.totalorder %s36, 1
      %p80 = por %p78, %p79
      %p82 = scmp.ne.s32.totalorder %s67, %s81
      %p83 = scmp.eq.s32.totalorder %s36, 0
      %p84 = por %p82, %p83
      %s86 = sadd.s32 %s85, 1
      %p89 = scmp.eq.s32.totalorder %s30, 1
      %p90 = scmp.ne.s32.totalorder %s85, %s87
      %p91 = scmp.eq.s32.totalorder %s30, 0
      %p92 = por %p90, %p91
      %p93 = scmp.ne.s32.totalorder %s85, %s87
      %p94 = scmp.eq.s32.totalorder %s35, 1
      %p95 = por %p93, %p94
      %p96 = scmp.ne.s32.totalorder %s87, %s88
      %p97 = scmp.eq.s32.totalorder %s35, 0
      %p98 = por %p96, %p97
      %p99 = scmp.ne.s32.totalorder %s87, %s88
      %p100 = scmp.eq.s32.totalorder %s36, 1
      %p101 = por %p99, %p100
      %p103 = scmp.ne.s32.totalorder %s88, %s102
      %p104 = scmp.eq.s32.totalorder %s36, 0
      %p105 = por %p103, %p104
      %s107 = sadd.s32 %s106, 1
      %p110 = scmp.eq.s32.totalorder %s30, 1
      %p111 = scmp.ne.s32.totalorder %s106, %s108
      %p112 = scmp.eq.s32.totalorder %s30, 0
      %p113 = por %p111, %p112
      %p114 = scmp.ne.s32.totalorder %s106, %s108
      %p115 = scmp.eq.s32.totalorder %s35, 1
      %p116 = por %p114, %p115
      %p117 = scmp.ne.s32.totalorder %s108, %s109
      %p118 = scmp.eq.s32.totalorder %s35, 0
      %p119 = por %p117, %p118
      %p120 = scmp.ne.s32.totalorder %s108, %s109
      %p121 = scmp.eq.s32.totalorder %s36, 1
      %p122 = por %p120, %p121
      %p124 = scmp.ne.s32.totalorder %s109, %s123
      %p125 = scmp.eq.s32.totalorder %s36, 0
      %p126 = por %p124, %p125
      %s128 = sadd.s32 %s127, 1
      %p131 = scmp.eq.s32.totalorder %s30, 1
      %p132 = scmp.ne.s32.totalorder %s127, %s129
      %p133 = scmp.eq.s32.totalorder %s30, 0
      %p134 = por %p132, %p133
      %p135 = scmp.ne.s32.totalorder %s127, %s129
      %p136 = scmp.eq.s32.totalorder %s35, 1
      %p137 = por %p135, %p136
      %p138 = scmp.ne.s32.totalorder %s129, %s130
      %p139 = scmp.eq.s32.totalorder %s35, 0
      %p140 = por %p138, %p139
      %p141 = scmp.ne.s32.totalorder %s129, %s130
      %p142 = scmp.eq.s32.totalorder %s36, 1
      %p143 = por %p141, %p142
      %p145 = scmp.ne.s32.totalorder %s130, %s144
      %p146 = scmp.eq.s32.totalorder %s36, 0
      %p147 = por %p145, %p146
      %s149 = sadd.s32 %s148, 1
      %p152 = scmp.eq.s32.totalorder %s30, 1
      %p153 = scmp.ne.s32.totalorder %s148, %s150
      %p154 = scmp.eq.s32.totalorder %s30, 0
      %p155 = por %p153, %p154
      %p156 = scmp.ne.s32.totalorder %s148, %s150
      %p157 = scmp.eq.s32.totalorder %s35, 1
      %p158 = por %p156, %p157
      %p159 = scmp.ne.s32.totalorder %s150, %s151
      %p160 = scmp.eq.s32.totalorder %s35, 0
      %p161 = por %p159, %p160
      %p162 = scmp.ne.s32.totalorder %s150, %s151
      %p163 = scmp.eq.s32.totalorder %s36, 1
      %p164 = por %p162, %p163
      %p166 = scmp.ne.s32.totalorder %s151, %s165
      %p167 = scmp.eq.s32.totalorder %s36, 0
      %p168 = por %p166, %p167
      %s170 = sadd.s32 %s169, 1
      %p173 = scmp.eq.s32.totalorder %s30, 1
      %p174 = scmp.ne.s32.totalorder %s169, %s171
      %p175 = scmp.eq.s32.totalorder %s30, 0
      %p176 = por %p174, %p175
      %p177 = scmp.ne.s32.totalorder %s169, %s171
      %p178 = scmp.eq.s32.totalorder %s35, 1
      %p179 = por %p177, %p178
      %p180 = scmp.ne.s32.totalorder %s171, %s172
      %p181 = scmp.eq.s32.totalorder %s35, 0
      %p182 = por %p180, %p181
      %p183 = scmp.ne.s32.totalorder %s171, %s172
      %p184 = scmp.eq.s32.totalorder %s36, 1
      %p185 = por %p183, %p184
      %p187 = scmp.ne.s32.totalorder %s172, %s186
      %p188 = scmp.eq.s32.totalorder %s36, 0
      %p189 = por %p187, %p188
      %s191 = sadd.s32 %s190, 1
      %p194 = scmp.eq.s32.totalorder %s30, 1
      %p195 = scmp.ne.s32.totalorder %s190, %s192
      %p196 = scmp.eq.s32.totalorder %s30, 0
      %p197 = por %p195, %p196
      %p198 = scmp.ne.s32.totalorder %s190, %s192
      %p199 = scmp.eq.s32.totalorder %s35, 1
      %p200 = por %p198, %p199
      %p201 = scmp.ne.s32.totalorder %s192, %s193
      %p202 = scmp.eq.s32.totalorder %s35, 0
      %p203 = por %p201, %p202
      %p204 = scmp.ne.s32.totalorder %s192, %s193
      %p205 = scmp.eq.s32.totalorder %s36, 1
      %p206 = por %p204, %p205
      %p208 = scmp.ne.s32.totalorder %s193, %s207
      %p209 = scmp.eq.s32.totalorder %s36, 0
      %p210 = por %p208, %p209
      %s212 = sadd.s32 %s211, 1
      %p215 = scmp.eq.s32.totalorder %s30, 1
      %p216 = scmp.ne.s32.totalorder %s211, %s213
      %p217 = scmp.eq.s32.totalorder %s30, 0
      %p218 = por %p216, %p217
      %p219 = scmp.ne.s32.totalorder %s211, %s213
      %p220 = scmp.eq.s32.totalorder %s35, 1
      %p221 = por %p219, %p220
      %p222 = scmp.ne.s32.totalorder %s213, %s214
      %p223 = scmp.eq.s32.totalorder %s35, 0
      %p224 = por %p222, %p223
      %p225 = scmp.ne.s32.totalorder %s213, %s214
      %p226 = scmp.eq.s32.totalorder %s36, 1
      %p227 = por %p225, %p226
      %p229 = scmp.ne.s32.totalorder %s214, %s228
      %p230 = scmp.eq.s32.totalorder %s36, 0
      %p231 = por %p229, %p230
      %s233 = sadd.s32 %s232, 1
      %p236 = scmp.eq.s32.totalorder %s30, 1
      %p237 = scmp.ne.s32.totalorder %s232, %s234
      %p238 = scmp.eq.s32.totalorder %s30, 0
      %p239 = por %p237, %p238
      %p240 = scmp.ne.s32.totalorder %s232, %s234
      %p241 = scmp.eq.s32.totalorder %s35, 1
      %p242 = por %p240, %p241
      %p243 = scmp.ne.s32.totalorder %s234, %s235
      %p244 = scmp.eq.s32.totalorder %s35, 0
      %p245 = por %p243, %p244
      %p246 = scmp.ne.s32.totalorder %s234, %s235
      %p247 = scmp.eq.s32.totalorder %s36, 1
      %p248 = por %p246, %p247
      %p250 = scmp.ne.s32.totalorder %s235, %s249
      %p251 = scmp.eq.s32.totalorder %s36, 0
      %p252 = por %p250, %p251
      %s254 = sadd.s32 %s253, 1
      %p257 = scmp.eq.s32.totalorder %s30, 1
      %p258 = scmp.ne.s32.totalorder %s253, %s255
      %p259 = scmp.eq.s32.totalorder %s30, 0
      %p260 = por %p258, %p259
      %p261 = scmp.ne.s32.totalorder %s253, %s255
      %p262 = scmp.eq.s32.totalorder %s35, 1
      %p263 = por %p261, %p262
      %p264 = scmp.ne.s32.totalorder %s255, %s256
      %p265 = scmp.eq.s32.totalorder %s35, 0
      %p266 = por %p264, %p265
      %p267 = scmp.ne.s32.totalorder %s255, %s256
      %p268 = scmp.eq.s32.totalorder %s36, 1
      %p269 = por %p267, %p268
      %p271 = scmp.ne.s32.totalorder %s256, %s270
      %p272 = scmp.eq.s32.totalorder %s36, 0
      %p273 = por %p271, %p272
      %s274 = ssub.s32 %s30, %s37
      %p275 = scmp.eq.s32.totalorder %s274, 0
      %s277 = sadd.s32 %s276, 1
      %s278 = scalar_select %p275, %s276, %s277
      %p281 = pneg %p275
      %p282 = scmp.eq.s32.totalorder %s30, 1
      %p283 = por %p281, %p282
      %p284 = scmp.ne.s32.totalorder %s276, %s279
      %p285 = scmp.eq.s32.totalorder %s30, 0
      %p286 = por %p284, %p285
      %p287 = scmp.ne.s32.totalorder %s276, %s279
      %p288 = scmp.eq.s32.totalorder %s35, 1
      %p289 = por %p287, %p288
      %p290 = scmp.ne.s32.totalorder %s279, %s280
      %p291 = scmp.eq.s32.totalorder %s35, 0
      %p292 = por %p290, %p291
      %p293 = scmp.ne.s32.totalorder %s279, %s280
      %p294 = scmp.eq.s32.totalorder %s36, 1
      %p295 = por %p293, %p294
      %p297 = scmp.ne.s32.totalorder %s280, %s296
      %p298 = scmp.eq.s32.totalorder %s36, 0
      %p299 = por %p297, %p298
      %p300 = scmp.le.s32.totalorder 1, %s30
      %p301 = scmp.lt.s32.totalorder %s30, 3
      %p302 = pnand %p300, %p301
      %p303 = pneg %p302
      // Predicated region
      $region9: #{tpu_custom_call.1} parent=5 // pred_check
        _
      $region10: #{tpu_custom_call.1} parent=5 // pred_check_branch
        %305 = sbr.rel (%p302) target = $region12
      $region11: #{tpu_custom_call.1} parent=5 // pred_region
        %s306 = ssub.s32 %s30, 1
        // Predicated region
        $region13: #{tpu_custom_call.1} parent=11 // pred_check
          %p307 = pneg %p77
        $region14: #{tpu_custom_call.1} parent=11 // pred_check_branch
          %309 = sbr.rel (%p307) target = $region16
        $region15: #{tpu_custom_call.1} parent=11 // pred_region
          %s311 = ssub.s32 1536, 1536
          %312 = vsyncadd [#allocation7], %s311
          %s313 = sshll.u32 [#allocation6], 4
          %s314 = int_to_ptr.vmem [resolvable:$true] %s313
          %319 = dma.hbm_to_vmem [thread:$0]  %s1, 1536, %s314, [#allocation7], 128, 128, 8
        $region16: #{tpu_custom_call.1} parent=11 // pred_fallthru
          _
        // Predicated region
        $region17: #{tpu_custom_call.1} parent=11 // pred_check
          %p320 = pneg %p98
        $region18: #{tpu_custom_call.1} parent=11 // pred_check_branch
          %322 = sbr.rel (%p320) target = $region20
        $region19: #{tpu_custom_call.1} parent=11 // pred_region
          %s324 = ssub.s32 16, 16
          %325 = vsyncadd [#allocation7], %s324
          %s327 = sshll.u32 [#allocation8], 4
          %s328 = int_to_ptr.vmem [resolvable:$true] %s327
          %330 = dma.hbm_to_vmem [thread:$0]  %s2, 16, %s328, [#allocation7]
        $region20: #{tpu_custom_call.1} parent=11 // pred_fallthru
          _
        // Predicated region
        $region21: #{tpu_custom_call.1} parent=11 // pred_check
          %p331 = pneg %p119
        $region22: #{tpu_custom_call.1} parent=11 // pred_check_branch
          %333 = sbr.rel (%p331) target = $region24
        $region23: #{tpu_custom_call.1} parent=11 // pred_region
          %s335 = ssub.s32 16, 16
          %336 = vsyncadd [#allocation10], %s335
          %s338 = sshll.u32 [#allocation9], 4
          %s339 = int_to_ptr.vmem [resolvable:$true] %s338
          %341 = dma.hbm_to_vmem [thread:$0]  %s3, 16, %s339, [#allocation10]
        $region24: #{tpu_custom_call.1} parent=11 // pred_fallthru
          _
        // Predicated region
        $region25: #{tpu_custom_call.1} parent=11 // pred_check
          %p342 = pneg %p140
        $region26: #{tpu_custom_call.1} parent=11 // pred_check_branch
          %344 = sbr.rel (%p342) target = $region28
        $region27: #{tpu_custom_call.1} parent=11 // pred_region
          %s346 = ssub.s32 16, 16
          %347 = vsyncadd [#allocation10], %s346
          %s349 = sshll.u32 [#allocation11], 4
          %s350 = int_to_ptr.vmem [resolvable:$true] %s349
          %352 = dma.hbm_to_vmem [thread:$0]  %s4, 16, %s350, [#allocation10]
        $region28: #{tpu_custom_call.1} parent=11 // pred_fallthru
          _
        // Predicated region
        $region29: #{tpu_custom_call.1} parent=11 // pred_check
          %p353 = pneg %p161
        $region30: #{tpu_custom_call.1} parent=11 // pred_check_branch
          %355 = sbr.rel (%p353) target = $region32
        $region31: #{tpu_custom_call.1} parent=11 // pred_region
          %s357 = ssub.s32 1536, 1536
          %358 = vsyncadd [#allocation13], %s357
          %s359 = sshll.u32 [#allocation12], 4
          %s360 = int_to_ptr.vmem [resolvable:$true] %s359
          %365 = dma.hbm_to_vmem [thread:$0]  %s5, 1536, %s360, [#allocation13], 128, 128, 8
        $region32: #{tpu_custom_call.1} parent=11 // pred_fallthru
          _
        // Predicated region
        $region33: #{tpu_custom_call.1} parent=11 // pred_check
          %p366 = pneg %p182
        $region34: #{tpu_custom_call.1} parent=11 // pred_check_branch
          %368 = sbr.rel (%p366) target = $region36
        $region35: #{tpu_custom_call.1} parent=11 // pred_region
          %s370 = ssub.s32 16, 16
          %371 = vsyncadd [#allocation13], %s370
          %s373 = sshll.u32 [#allocation14], 4
          %s374 = int_to_ptr.vmem [resolvable:$true] %s373
          %376 = dma.hbm_to_vmem [thread:$0]  %s6, 16, %s374, [#allocation13]
        $region36: #{tpu_custom_call.1} parent=11 // pred_fallthru
          _
        // Predicated region
        $region37: #{tpu_custom_call.1} parent=11 // pred_check
          %p377 = pneg %p203
        $region38: #{tpu_custom_call.1} parent=11 // pred_check_branch
          %379 = sbr.rel (%p377) target = $region40
        $region39: #{tpu_custom_call.1} parent=11 // pred_region
          %s381 = ssub.s32 16, 16
          %382 = vsyncadd [#allocation16], %s381
          %s384 = sshll.u32 [#allocation15], 4
          %s385 = int_to_ptr.vmem [resolvable:$true] %s384
          %387 = dma.hbm_to_vmem [thread:$0]  %s7, 16, %s385, [#allocation16]
        $region40: #{tpu_custom_call.1} parent=11 // pred_fallthru
          _
        // Predicated region
        $region41: #{tpu_custom_call.1} parent=11 // pred_check
          %p388 = pneg %p224
        $region42: #{tpu_custom_call.1} parent=11 // pred_check_branch
          %390 = sbr.rel (%p388) target = $region44
        $region43: #{tpu_custom_call.1} parent=11 // pred_region
          %s392 = ssub.s32 16, 16
          %393 = vsyncadd [#allocation16], %s392
          %s395 = sshll.u32 [#allocation17], 4
          %s396 = int_to_ptr.vmem [resolvable:$true] %s395
          %398 = dma.hbm_to_vmem [thread:$0]  %s8, 16, %s396, [#allocation16]
        $region44: #{tpu_custom_call.1} parent=11 // pred_fallthru
          _
        // Predicated region
        $region45: #{tpu_custom_call.1} parent=11 // pred_check
          %p399 = pneg %p245
        $region46: #{tpu_custom_call.1} parent=11 // pred_check_branch
          %401 = sbr.rel (%p399) target = $region48
        $region47: #{tpu_custom_call.1} parent=11 // pred_region
          %s403 = ssub.s32 16, 16
          %404 = vsyncadd [#allocation19], %s403
          %s406 = sshll.u32 [#allocation18], 4
          %s407 = int_to_ptr.vmem [resolvable:$true] %s406
          %409 = dma.hbm_to_vmem [thread:$0]  %s9, 16, %s407, [#allocation19]
        $region48: #{tpu_custom_call.1} parent=11 // pred_fallthru
          _
        // Predicated region
        $region49: #{tpu_custom_call.1} parent=11 // pred_check
          %p410 = pneg %p266
        $region50: #{tpu_custom_call.1} parent=11 // pred_check_branch
          %412 = sbr.rel (%p410) target = $region52
        $region51: #{tpu_custom_call.1} parent=11 // pred_region
          _
        $region52: #{tpu_custom_call.1} parent=11 // pred_fallthru
          _
      $region12: #{tpu_custom_call.1} parent=5 // pred_fallthru
        _
      %p413 = scmp.lt.s32.totalorder %s30, 2
      // Predicated region
      $region53: #{tpu_custom_call.1} parent=5 // pred_check
        %p414 = pneg %p413
      $region54: #{tpu_custom_call.1} parent=5 // pred_check_branch
        %416 = sbr.rel (%p414) target = $region56
      $region55: #{tpu_custom_call.1} parent=5 // pred_region
        // Predicated region
        $region57: #{tpu_custom_call.1} parent=55 // pred_check
          %p417 = pneg %p50
        $region58: #{tpu_custom_call.1} parent=55 // pred_check_branch
          %419 = sbr.rel (%p417) target = $region60
        $region59: #{tpu_custom_call.1} parent=55 // pred_region
          %s420 = sand.u32 %s40, 1
          %s421 = scalar_lea.sflag [#allocation4], %s420
          %s422 = sand.u32 %s40, 1
          %s423 = smul.addr %s422, 8
          %s424 = scalar_lea.vmem [#allocation3], %s423
          %s426 = ssub.s32 128, 128
          %427 = vsyncadd %s421, %s426
          %s428 = smul.addr %s30, 128
          %s429 = scalar_lea.hbm %s0, %s428
          %s431 = sshll.u32 %s424, 4
          %s432 = int_to_ptr.vmem [resolvable:$true] %s431
          %434 = dma.hbm_to_vmem [thread:$0]  %s429, 128, %s432, %s421
        $region60: #{tpu_custom_call.1} parent=55 // pred_fallthru
          _
      $region56: #{tpu_custom_call.1} parent=5 // pred_fallthru
        _
      %p435 = scmp.le.s32.totalorder 1, %s30
      %p436 = scmp.lt.s32.totalorder %s30, 3
      %p437 = pnand %p435, %p436
      %p438 = pneg %p437
      // Predicated region
      $region61: #{tpu_custom_call.1} parent=5 // pred_check
        _
      $region62: #{tpu_custom_call.1} parent=5 // pred_check_branch
        %440 = sbr.rel (%p437) target = $region64
      $region63: #{tpu_custom_call.1} parent=5 // pred_region
        %s441 = ssub.s32 %s30, 1
        %s442 = sand.u32 %s43, 1
        %s443 = scalar_lea.sflag [#allocation4], %s442
        %s444 = sand.u32 %s43, 1
        %s445 = smul.addr %s444, 8
        %s446 = scalar_lea.vmem [#allocation3], %s445
        // Predicated region
        $region65: #{tpu_custom_call.1} parent=63 // pred_check
          %p447 = pneg %p56
        $region66: #{tpu_custom_call.1} parent=63 // pred_check_branch
          %449 = sbr.rel (%p447) target = $region68
        $region67: #{tpu_custom_call.1} parent=63 // pred_region
          %450 = dma.done %s443, 128
        $region68: #{tpu_custom_call.1} parent=63 // pred_fallthru
          _
        // Predicated region
        $region69: #{tpu_custom_call.1} parent=63 // pred_check
          %p451 = pneg %p77
        $region70: #{tpu_custom_call.1} parent=63 // pred_check_branch
          %453 = sbr.rel (%p451) target = $region72
        $region71: #{tpu_custom_call.1} parent=63 // pred_region
          %454 = dma.done [#allocation7], 1536
        $region72: #{tpu_custom_call.1} parent=63 // pred_fallthru
          _
        // Predicated region
        $region73: #{tpu_custom_call.1} parent=63 // pred_check
          %p455 = pneg %p98
        $region74: #{tpu_custom_call.1} parent=63 // pred_check_branch
          %457 = sbr.rel (%p455) target = $region76
        $region75: #{tpu_custom_call.1} parent=63 // pred_region
          %458 = dma.done [#allocation7], 16
        $region76: #{tpu_custom_call.1} parent=63 // pred_fallthru
          _
        // Predicated region
        $region77: #{tpu_custom_call.1} parent=63 // pred_check
          %p459 = pneg %p119
        $region78: #{tpu_custom_call.1} parent=63 // pred_check_branch
          %461 = sbr.rel (%p459) target = $region80
        $region79: #{tpu_custom_call.1} parent=63 // pred_region
          %462 = dma.done [#allocation10], 16
        $region80: #{tpu_custom_call.1} parent=63 // pred_fallthru
          _
        // Predicated region
        $region81: #{tpu_custom_call.1} parent=63 // pred_check
          %p463 = pneg %p140
        $region82: #{tpu_custom_call.1} parent=63 // pred_check_branch
          %465 = sbr.rel (%p463) target = $region84
        $region83: #{tpu_custom_call.1} parent=63 // pred_region
          %466 = dma.done [#allocation10], 16
        $region84: #{tpu_custom_call.1} parent=63 // pred_fallthru
          _
        // Predicated region
        $region85: #{tpu_custom_call.1} parent=63 // pred_check
          %p467 = pneg %p161
        $region86: #{tpu_custom_call.1} parent=63 // pred_check_branch
          %469 = sbr.rel (%p467) target = $region88
        $region87: #{tpu_custom_call.1} parent=63 // pred_region
          %470 = dma.done [#allocation13], 1536
        $region88: #{tpu_custom_call.1} parent=63 // pred_fallthru
          _
        // Predicated region
        $region89: #{tpu_custom_call.1} parent=63 // pred_check
          %p471 = pneg %p182
        $region90: #{tpu_custom_call.1} parent=63 // pred_check_branch
          %473 = sbr.rel (%p471) target = $region92
        $region91: #{tpu_custom_call.1} parent=63 // pred_region
          %474 = dma.done [#allocation13], 16
        $region92: #{tpu_custom_call.1} parent=63 // pred_fallthru
          _
        // Predicated region
        $region93: #{tpu_custom_call.1} parent=63 // pred_check
          %p475 = pneg %p203
        $region94: #{tpu_custom_call.1} parent=63 // pred_check_branch
          %477 = sbr.rel (%p475) target = $region96
        $region95: #{tpu_custom_call.1} parent=63 // pred_region
          %478 = dma.done [#allocation16], 16
        $region96: #{tpu_custom_call.1} parent=63 // pred_fallthru
          _
        // Predicated region
        $region97: #{tpu_custom_call.1} parent=63 // pred_check
          %p479 = pneg %p224
        $region98: #{tpu_custom_call.1} parent=63 // pred_check_branch
          %481 = sbr.rel (%p479) target = $region100
        $region99: #{tpu_custom_call.1} parent=63 // pred_region
          %482 = dma.done [#allocation16], 16
        $region100: #{tpu_custom_call.1} parent=63 // pred_fallthru
          _
        // Predicated region
        $region101: #{tpu_custom_call.1} parent=63 // pred_check
          %p483 = pneg %p245
        $region102: #{tpu_custom_call.1} parent=63 // pred_check_branch
          %485 = sbr.rel (%p483) target = $region104
        $region103: #{tpu_custom_call.1} parent=63 // pred_region
          %486 = dma.done [#allocation19], 16
        $region104: #{tpu_custom_call.1} parent=63 // pred_fallthru
          _
        %s487 = sand.u32 %s43, 1
        %s488 = scalar_lea.sflag [#allocation4], %s487
        %s489 = sand.u32 %s43, 1
        %s490 = smul.addr %s489, 8
        %s491 = scalar_lea.vmem [#allocation3], %s490
        %p492 = pneg %p56
        %p493 = pneg %p53
        %p494 = pneg %p77
        %p495 = pneg %p74
        %p496 = pneg %p98
        %p497 = pneg %p95
        %p498 = pneg %p119
        %p499 = pneg %p116
        %p500 = pneg %p140
        %p501 = pneg %p137
        %p502 = pneg %p161
        %p503 = pneg %p158
        %p504 = pneg %p182
        %p505 = pneg %p179
        %p506 = pneg %p203
        %p507 = pneg %p200
        %p508 = pneg %p224
        %p509 = pneg %p221
        %p510 = pneg %p245
        %p511 = pneg %p242
        %p512 = pneg %p266
        %p513 = pneg %p263
        %p514 = pneg %p292
        %p515 = pneg %p289
        %s516 = sand.u32 %s279, 1
        %s517 = scalar_lea.sflag [#allocation5], %s516
        %s518 = sand.u32 %s279, 1
        %s519 = scalar_lea.vmem [#allocation20], %s518
        %v520 = vld [vmem:[%s446] sm:$0xff]
        %v521 = vld [vmem:[#allocation6] sm:$0xff]
        %v522 = vld [vmem:[#allocation6 + $0x8] sm:$0xff]
        %v523 = vld [vmem:[#allocation6 + $0x10] sm:$0xff]
        %v524 = vld [vmem:[#allocation6 + $0x18] sm:$0xff]
        %v525 = vld [vmem:[#allocation6 + $0x20] sm:$0xff]
        %v526 = vld [vmem:[#allocation6 + $0x28] sm:$0xff]
        %v527 = vld [vmem:[#allocation6 + $0x30] sm:$0xff]
        %v528 = vld [vmem:[#allocation6 + $0x38] sm:$0xff]
        %v529 = vld [vmem:[#allocation6 + $0x40] sm:$0xff]
        %v530 = vld [vmem:[#allocation6 + $0x48] sm:$0xff]
        %v531 = vld [vmem:[#allocation6 + $0x50] sm:$0xff]
        %v532 = vld [vmem:[#allocation6 + $0x58] sm:$0xff]
        %v533 = vld [vmem:[#allocation8] sm:$0x1]
        %v534 = vld [vmem:[#allocation9] sm:$0x1]
        %v535 = vld [vmem:[#allocation11] sm:$0x1]
        %v536 = vlaneseq
        %v537 = vshrl.u32 %v536, 7
        %v538 = vrot.slane %v520, 7
        %v539 = vadd.s32 %v537, 4294967295
        %vm540 = vcmp.ge.s32.totalorder %v539, 0
        %vm541 = vcmp.lt.s32.totalorder %v539, 8
        %vm542 = vmand %vm540, %vm541
        %v543 = vsel %vm542, 1, 0
        %vm544 = vcmp.eq.s32.totalorder %v543, 1
        %v545 = vsel %vm544, %v538, 0.0
        %vm546 = vcmask 261120
        %v548 = vsel %vm546, %v520, 0
        %550 = vmatprep.subr.mxu0 0.0
        %551 = vmatpush1.msra.mxu0 %v525
        %552 = vmatprep.subr.mxu0 0.0
        %553 = vmatpush1.msra.mxu0 %v526
        %554 = vmatprep.subr.mxu0 0.0
        %555 = vmatpush1.msra.mxu0 %v527
        %556 = vmatprep.subr.mxu0 0.0
        %557 = vmatpush1.msra.mxu0 %v528
        %558 = vmatprep.subr.mxu0 0.0
        %559 = vmatpush1.msra.mxu0 0.0
        %560 = vmatprep.subr.mxu0 0.0
        %561 = vmatpush1.msra.mxu0 0.0
        %562 = vmatprep.subr.mxu0 0.0
        %563 = vmatpush1.msra.mxu0 0.0
        %564 = vmatprep.subr.mxu0 0.0
        %565 = vmatpush1.msra.mxu0 0.0
        %566 = vmatprep.subr.mxu0 0.0
        %567 = vmatpush1.msra.mxu0 0.0
        %568 = vmatprep.subr.mxu0 0.0
        %569 = vmatpush1.msra.mxu0 0.0
        %570 = vmatprep.subr.mxu0 0.0
        %571 = vmatpush1.msra.mxu0 0.0
        %572 = vmatprep.subr.mxu0 0.0
        %573 = vmatpush1.msra.mxu0 0.0
        %574 = vmatprep.subr.mxu0 0.0
        %575 = vmatpush1.msra.mxu0 0.0
        %576 = vmatprep.subr.mxu0 0.0
        %577 = vmatpush1.msra.mxu0 0.0
        %578 = vmatprep.subr.mxu0 0.0
        %579 = vmatpush1.msra.mxu0 0.0
        %580 = vmatprep.subr.mxu0 0.0
        %581 = vmatpush1.msra.mxu0 0.0
        %582 = vmatprep.subr.mxu0 0.0
        %583 = vmatpush1.msra.mxu0 0.0
        %584 = vmatprep.subr.mxu0 0.0
        %585 = vmatpush1.msra.mxu0 0.0
        %586 = vmatprep.subr.mxu0 0.0
        %587 = vmatpush1.msra.mxu0 0.0
        %588 = vmatprep.subr.mxu0 0.0
        %589 = vmatpush1.msra.mxu0 0.0
        %590 = vmatprep.subr.mxu0 0.0
        %591 = vmatpush1.msra.mxu0 0.0
        %592 = vmatprep.subr.mxu0 0.0
        %593 = vmatpush1.msra.mxu0 0.0
        %594 = vmatprep.subr.mxu0 0.0
        %595 = vmatpush1.msra.mxu0 0.0
        %596 = vmatprep.subr.mxu0 0.0
        %597 = vmatpush1.msra.mxu0 0.0
        %598 = vmatprep.subr.mxu0 0.0
        %599 = vmatpush1.msra.mxu0 0.0
        %600 = vmatprep.subr.mxu0 0.0
        %601 = vmatpush1.msra.mxu0 0.0
        %602 = vmatprep.subr.mxu0 0.0
        %603 = vmatpush1.msra.mxu0 0.0
        %604 = vmatprep.subr.mxu0 0.0
        %605 = vmatpush1.msra.mxu0 0.0
        %606 = vmatprep.subr.mxu0 0.0
        %607 = vmatpush1.msra.mxu0 0.0
        %608 = vmatprep.subr.mxu0 0.0
        %609 = vmatpush1.msra.mxu0 0.0
        %610 = vmatprep.subr.mxu0 0.0
        %611 = vmatpush1.msra.mxu0 0.0
        %612 = vmatprep.subr.mxu0 0.0
        %613 = vmatpush1.msra.mxu0 0.0
        %614 = vmatprep.mubr.f32.mxu0 0.0
        %615 = vmatmul.mubr.f32.gmra.mrb[0].mxu0 %v548
        %v616 = vpop.f32.mrb[0].mxu0
        %v617 = vadd.f32 0.0, %v616
        %v618 = vpop.f32.mrb[0].mxu0
        %619 = vdwg.mxu0
        %v621 = vsel %vm546, %v545, 0
        %623 = vmatprep.subr.mxu0 0.0
        %624 = vmatpush1.msra.mxu0 %v521
        %625 = vmatprep.subr.mxu0 0.0
        %626 = vmatpush1.msra.mxu0 %v522
        %627 = vmatprep.subr.mxu0 0.0
        %628 = vmatpush1.msra.mxu0 %v523
        %629 = vmatprep.subr.mxu0 0.0
        %630 = vmatpush1.msra.mxu0 %v524
        %631 = vmatprep.subr.mxu0 0.0
        %632 = vmatpush1.msra.mxu0 0.0
        %633 = vmatprep.subr.mxu0 0.0
        %634 = vmatpush1.msra.mxu0 0.0
        %635 = vmatprep.subr.mxu0 0.0
        %636 = vmatpush1.msra.mxu0 0.0
        %637 = vmatprep.subr.mxu0 0.0
        %638 = vmatpush1.msra.mxu0 0.0
        %639 = vmatprep.subr.mxu0 0.0
        %640 = vmatpush1.msra.mxu0 0.0
        %641 = vmatprep.subr.mxu0 0.0
        %642 = vmatpush1.msra.mxu0 0.0
        %643 = vmatprep.subr.mxu0 0.0
        %644 = vmatpush1.msra.mxu0 0.0
        %645 = vmatprep.subr.mxu0 0.0
        %646 = vmatpush1.msra.mxu0 0.0
        %647 = vmatprep.subr.mxu0 0.0
        %648 = vmatpush1.msra.mxu0 0.0
        %649 = vmatprep.subr.mxu0 0.0
        %650 = vmatpush1.msra.mxu0 0.0
        %651 = vmatprep.subr.mxu0 0.0
        %652 = vmatpush1.msra.mxu0 0.0
        %653 = vmatprep.subr.mxu0 0.0
        %654 = vmatpush1.msra.mxu0 0.0
        %655 = vmatprep.subr.mxu0 0.0
        %656 = vmatpush1.msra.mxu0 0.0
        %657 = vmatprep.subr.mxu0 0.0
        %658 = vmatpush1.msra.mxu0 0.0
        %659 = vmatprep.subr.mxu0 0.0
        %660 = vmatpush1.msra.mxu0 0.0
        %661 = vmatprep.subr.mxu0 0.0
        %662 = vmatpush1.msra.mxu0 0.0
        %663 = vmatprep.subr.mxu0 0.0
        %664 = vmatpush1.msra.mxu0 0.0
        %665 = vmatprep.subr.mxu0 0.0
        %666 = vmatpush1.msra.mxu0 0.0
        %667 = vmatprep.subr.mxu0 0.0
        %668 = vmatpush1.msra.mxu0 0.0
        %669 = vmatprep.subr.mxu0 0.0
        %670 = vmatpush1.msra.mxu0 0.0
        %671 = vmatprep.subr.mxu0 0.0
        %672 = vmatpush1.msra.mxu0 0.0
        %673 = vmatprep.subr.mxu0 0.0
        %674 = vmatpush1.msra.mxu0 0.0
        %675 = vmatprep.subr.mxu0 0.0
        %676 = vmatpush1.msra.mxu0 0.0
        %677 = vmatprep.subr.mxu0 0.0
        %678 = vmatpush1.msra.mxu0 0.0
        %679 = vmatprep.subr.mxu0 0.0
        %680 = vmatpush1.msra.mxu0 0.0
        %681 = vmatprep.subr.mxu0 0.0
        %682 = vmatpush1.msra.mxu0 0.0
        %683 = vmatprep.subr.mxu0 0.0
        %684 = vmatpush1.msra.mxu0 0.0
        %685 = vmatprep.subr.mxu0 0.0
        %686 = vmatpush1.msra.mxu0 0.0
        %687 = vmatprep.mubr.f32.mxu0 0.0
        %688 = vmatmul.mubr.f32.gmra.mrb[0].mxu0 %v621
        %v689 = vpop.f32.mrb[0].mxu0
        %v690 = vadd.f32 %v617, %v689
        %v691 = vpop.f32.mrb[0].mxu0
        %692 = vdwg.mxu0
        %v693 = vrot.slane %v520, 1
        %v694 = vadd.s32 %v537, 1
        %vm695 = vcmp.ge.s32.totalorder %v694, 0
        %vm696 = vcmp.lt.s32.totalorder %v694, 8
        %vm697 = vmand %vm695, %vm696
        %v698 = vsel %vm697, 1, 0
        %vm699 = vcmp.eq.s32.totalorder %v698, 1
        %v700 = vsel %vm699, %v693, 0.0
        %v702 = vsel %vm546, %v700, 0
        %704 = vmatprep.subr.mxu0 0.0
        %705 = vmatpush1.msra.mxu0 %v529
        %706 = vmatprep.subr.mxu0 0.0
        %707 = vmatpush1.msra.mxu0 %v530
        %708 = vmatprep.subr.mxu0 0.0
        %709 = vmatpush1.msra.mxu0 %v531
        %710 = vmatprep.subr.mxu0 0.0
        %711 = vmatpush1.msra.mxu0 %v532
        %712 = vmatprep.subr.mxu0 0.0
        %713 = vmatpush1.msra.mxu0 0.0
        %714 = vmatprep.subr.mxu0 0.0
        %715 = vmatpush1.msra.mxu0 0.0
        %716 = vmatprep.subr.mxu0 0.0
        %717 = vmatpush1.msra.mxu0 0.0
        %718 = vmatprep.subr.mxu0 0.0
        %719 = vmatpush1.msra.mxu0 0.0
        %720 = vmatprep.subr.mxu0 0.0
        %721 = vmatpush1.msra.mxu0 0.0
        %722 = vmatprep.subr.mxu0 0.0
        %723 = vmatpush1.msra.mxu0 0.0
        %724 = vmatprep.subr.mxu0 0.0
        %725 = vmatpush1.msra.mxu0 0.0
        %726 = vmatprep.subr.mxu0 0.0
        %727 = vmatpush1.msra.mxu0 0.0
        %728 = vmatprep.subr.mxu0 0.0
        %729 = vmatpush1.msra.mxu0 0.0
        %730 = vmatprep.subr.mxu0 0.0
        %731 = vmatpush1.msra.mxu0 0.0
        %732 = vmatprep.subr.mxu0 0.0
        %733 = vmatpush1.msra.mxu0 0.0
        %734 = vmatprep.subr.mxu0 0.0
        %735 = vmatpush1.msra.mxu0 0.0
        %736 = vmatprep.subr.mxu0 0.0
        %737 = vmatpush1.msra.mxu0 0.0
        %738 = vmatprep.subr.mxu0 0.0
        %739 = vmatpush1.msra.mxu0 0.0
        %740 = vmatprep.subr.mxu0 0.0
        %741 = vmatpush1.msra.mxu0 0.0
        %742 = vmatprep.subr.mxu0 0.0
        %743 = vmatpush1.msra.mxu0 0.0
        %744 = vmatprep.subr.mxu0 0.0
        %745 = vmatpush1.msra.mxu0 0.0
        %746 = vmatprep.subr.mxu0 0.0
        %747 = vmatpush1.msra.mxu0 0.0
        %748 = vmatprep.subr.mxu0 0.0
        %749 = vmatpush1.msra.mxu0 0.0
        %750 = vmatprep.subr.mxu0 0.0
        %751 = vmatpush1.msra.mxu0 0.0
        %752 = vmatprep.subr.mxu0 0.0
        %753 = vmatpush1.msra.mxu0 0.0
        %754 = vmatprep.subr.mxu0 0.0
        %755 = vmatpush1.msra.mxu0 0.0
        %756 = vmatprep.subr.mxu0 0.0
        %757 = vmatpush1.msra.mxu0 0.0
        %758 = vmatprep.subr.mxu0 0.0
        %759 = vmatpush1.msra.mxu0 0.0
        %760 = vmatprep.subr.mxu0 0.0
        %761 = vmatpush1.msra.mxu0 0.0
        %762 = vmatprep.subr.mxu0 0.0
        %763 = vmatpush1.msra.mxu0 0.0
        %764 = vmatprep.subr.mxu0 0.0
        %765 = vmatpush1.msra.mxu0 0.0
        %766 = vmatprep.subr.mxu0 0.0
        %767 = vmatpush1.msra.mxu0 0.0
        %768 = vmatprep.mubr.f32.mxu0 0.0
        %769 = vmatmul.mubr.f32.gmra.mrb[0].mxu0 %v702
        %v770 = vpop.f32.mrb[0].mxu0
        %v771 = vadd.f32 0.0, %v770
        %v772 = vpop.f32.mrb[0].mxu0
        %773 = vdwg.mxu0
        %v774 = vadd.f32 %v690, %v771
        %v776 = vlaneseq
        %v777 = vshrl.u32 %v776, 7
        %v778 = vsub.s32 0, %v777
        %v779 = vrot.slane %v533, %v778
        %v781 = vadd.f32 %v774, %v779
        %v782 = vsel %vm546, %v781, 0.0
        %783 = vadd.xlane.f32.xlu0 %v782
        %v784 = vpop.xlane.xlu0 %783
        %v785 = vrcp.pop 32.0
        %v786 = vmul.f32 %v784, %v785
        %v787 = vsub.f32 %v781, %v786
        %v788 = vmul.f32 %v787, %v787
        %v789 = vsel %vm546, %v788, 0.0
        %790 = vadd.xlane.f32.xlu0 %v789
        %v791 = vpop.xlane.xlu0 %790
        %v792 = vmul.f32 %v791, %v785
        %v793 = vadd.f32 %v792, 1e-05
        %v794 = vrsqrt.pop %v793
        %v795 = vmul.f32 %v787, %v794
        %v797 = vlaneseq
        %v798 = vshrl.u32 %v797, 7
        %v799 = vsub.s32 0, %v798
        %v800 = vrot.slane %v534, %v799
        %v802 = vmul.f32 %v795, %v800
        %v804 = vlaneseq
        %v805 = vshrl.u32 %v804, 7
        %v806 = vsub.s32 0, %v805
        %v807 = vrot.slane %v535, %v806
        %v809 = vadd.f32 %v802, %v807
        %v810 = vmax.f32 %v809, 0.0
        %v811 = vld [vmem:[#allocation12] sm:$0xff]
        %v812 = vld [vmem:[#allocation12 + $0x8] sm:$0xff]
        %v813 = vld [vmem:[#allocation12 + $0x10] sm:$0xff]
        %v814 = vld [vmem:[#allocation12 + $0x18] sm:$0xff]
        %v815 = vld [vmem:[#allocation12 + $0x20] sm:$0xff]
        %v816 = vld [vmem:[#allocation12 + $0x28] sm:$0xff]
        %v817 = vld [vmem:[#allocation12 + $0x30] sm:$0xff]
        %v818 = vld [vmem:[#allocation12 + $0x38] sm:$0xff]
        %v819 = vld [vmem:[#allocation12 + $0x40] sm:$0xff]
        %v820 = vld [vmem:[#allocation12 + $0x48] sm:$0xff]
        %v821 = vld [vmem:[#allocation12 + $0x50] sm:$0xff]
        %v822 = vld [vmem:[#allocation12 + $0x58] sm:$0xff]
        %v823 = vld [vmem:[#allocation14] sm:$0x1]
        %v824 = vld [vmem:[#allocation15] sm:$0x1]
        %v825 = vld [vmem:[#allocation17] sm:$0x1]
        %v826 = vrot.slane %v810, 7
        %v827 = vsel %vm544, %v826, 0.0
        %v829 = vsel %vm546, %v810, 0
        %831 = vmatprep.subr.mxu0 0.0
        %832 = vmatpush1.msra.mxu0 %v815
        %833 = vmatprep.subr.mxu0 0.0
        %834 = vmatpush1.msra.mxu0 %v816
        %835 = vmatprep.subr.mxu0 0.0
        %836 = vmatpush1.msra.mxu0 %v817
        %837 = vmatprep.subr.mxu0 0.0
        %838 = vmatpush1.msra.mxu0 %v818
        %839 = vmatprep.subr.mxu0 0.0
        %840 = vmatpush1.msra.mxu0 0.0
        %841 = vmatprep.subr.mxu0 0.0
        %842 = vmatpush1.msra.mxu0 0.0
        %843 = vmatprep.subr.mxu0 0.0
        %844 = vmatpush1.msra.mxu0 0.0
        %845 = vmatprep.subr.mxu0 0.0
        %846 = vmatpush1.msra.mxu0 0.0
        %847 = vmatprep.subr.mxu0 0.0
        %848 = vmatpush1.msra.mxu0 0.0
        %849 = vmatprep.subr.mxu0 0.0
        %850 = vmatpush1.msra.mxu0 0.0
        %851 = vmatprep.subr.mxu0 0.0
        %852 = vmatpush1.msra.mxu0 0.0
        %853 = vmatprep.subr.mxu0 0.0
        %854 = vmatpush1.msra.mxu0 0.0
        %855 = vmatprep.subr.mxu0 0.0
        %856 = vmatpush1.msra.mxu0 0.0
        %857 = vmatprep.subr.mxu0 0.0
        %858 = vmatpush1.msra.mxu0 0.0
        %859 = vmatprep.subr.mxu0 0.0
        %860 = vmatpush1.msra.mxu0 0.0
        %861 = vmatprep.subr.mxu0 0.0
        %862 = vmatpush1.msra.mxu0 0.0
        %863 = vmatprep.subr.mxu0 0.0
        %864 = vmatpush1.msra.mxu0 0.0
        %865 = vmatprep.subr.mxu0 0.0
        %866 = vmatpush1.msra.mxu0 0.0
        %867 = vmatprep.subr.mxu0 0.0
        %868 = vmatpush1.msra.mxu0 0.0
        %869 = vmatprep.subr.mxu0 0.0
        %870 = vmatpush1.msra.mxu0 0.0
        %871 = vmatprep.subr.mxu0 0.0
        %872 = vmatpush1.msra.mxu0 0.0
        %873 = vmatprep.subr.mxu0 0.0
        %874 = vmatpush1.msra.mxu0 0.0
        %875 = vmatprep.subr.mxu0 0.0
        %876 = vmatpush1.msra.mxu0 0.0
        %877 = vmatprep.subr.mxu0 0.0
        %878 = vmatpush1.msra.mxu0 0.0
        %879 = vmatprep.subr.mxu0 0.0
        %880 = vmatpush1.msra.mxu0 0.0
        %881 = vmatprep.subr.mxu0 0.0
        %882 = vmatpush1.msra.mxu0 0.0
        %883 = vmatprep.subr.mxu0 0.0
        %884 = vmatpush1.msra.mxu0 0.0
        %885 = vmatprep.subr.mxu0 0.0
        %886 = vmatpush1.msra.mxu0 0.0
        %887 = vmatprep.subr.mxu0 0.0
        %888 = vmatpush1.msra.mxu0 0.0
        %889 = vmatprep.subr.mxu0 0.0
        %890 = vmatpush1.msra.mxu0 0.0
        %891 = vmatprep.subr.mxu0 0.0
        %892 = vmatpush1.msra.mxu0 0.0
        %893 = vmatprep.subr.mxu0 0.0
        %894 = vmatpush1.msra.mxu0 0.0
        %895 = vmatprep.mubr.f32.mxu0 0.0
        %896 = vmatmul.mubr.f32.gmra.mrb[0].mxu0 %v829
        %v897 = vpop.f32.mrb[0].mxu0
        %v898 = vadd.f32 0.0, %v897
        %v899 = vpop.f32.mrb[0].mxu0
        %900 = vdwg.mxu0
        %v902 = vsel %vm546, %v827, 0
        %904 = vmatprep.subr.mxu0 0.0
        %905 = vmatpush1.msra.mxu0 %v811
        %906 = vmatprep.subr.mxu0 0.0
        %907 = vmatpush1.msra.mxu0 %v812
        %908 = vmatprep.subr.mxu0 0.0
        %909 = vmatpush1.msra.mxu0 %v813
        %910 = vmatprep.subr.mxu0 0.0
        %911 = vmatpush1.msra.mxu0 %v814
        %912 = vmatprep.subr.mxu0 0.0
        %913 = vmatpush1.msra.mxu0 0.0
        %914 = vmatprep.subr.mxu0 0.0
        %915 = vmatpush1.msra.mxu0 0.0
        %916 = vmatprep.subr.mxu0 0.0
        %917 = vmatpush1.msra.mxu0 0.0
        %918 = vmatprep.subr.mxu0 0.0
        %919 = vmatpush1.msra.mxu0 0.0
        %920 = vmatprep.subr.mxu0 0.0
        %921 = vmatpush1.msra.mxu0 0.0
        %922 = vmatprep.subr.mxu0 0.0
        %923 = vmatpush1.msra.mxu0 0.0
        %924 = vmatprep.subr.mxu0 0.0
        %925 = vmatpush1.msra.mxu0 0.0
        %926 = vmatprep.subr.mxu0 0.0
        %927 = vmatpush1.msra.mxu0 0.0
        %928 = vmatprep.subr.mxu0 0.0
        %929 = vmatpush1.msra.mxu0 0.0
        %930 = vmatprep.subr.mxu0 0.0
        %931 = vmatpush1.msra.mxu0 0.0
        %932 = vmatprep.subr.mxu0 0.0
        %933 = vmatpush1.msra.mxu0 0.0
        %934 = vmatprep.subr.mxu0 0.0
        %935 = vmatpush1.msra.mxu0 0.0
        %936 = vmatprep.subr.mxu0 0.0
        %937 = vmatpush1.msra.mxu0 0.0
        %938 = vmatprep.subr.mxu0 0.0
        %939 = vmatpush1.msra.mxu0 0.0
        %940 = vmatprep.subr.mxu0 0.0
        %941 = vmatpush1.msra.mxu0 0.0
        %942 = vmatprep.subr.mxu0 0.0
        %943 = vmatpush1.msra.mxu0 0.0
        %944 = vmatprep.subr.mxu0 0.0
        %945 = vmatpush1.msra.mxu0 0.0
        %946 = vmatprep.subr.mxu0 0.0
        %947 = vmatpush1.msra.mxu0 0.0
        %948 = vmatprep.subr.mxu0 0.0
        %949 = vmatpush1.msra.mxu0 0.0
        %950 = vmatprep.subr.mxu0 0.0
        %951 = vmatpush1.msra.mxu0 0.0
        %952 = vmatprep.subr.mxu0 0.0
        %953 = vmatpush1.msra.mxu0 0.0
        %954 = vmatprep.subr.mxu0 0.0
        %955 = vmatpush1.msra.mxu0 0.0
        %956 = vmatprep.subr.mxu0 0.0
        %957 = vmatpush1.msra.mxu0 0.0
        %958 = vmatprep.subr.mxu0 0.0
        %959 = vmatpush1.msra.mxu0 0.0
        %960 = vmatprep.subr.mxu0 0.0
        %961 = vmatpush1.msra.mxu0 0.0
        %962 = vmatprep.subr.mxu0 0.0
        %963 = vmatpush1.msra.mxu0 0.0
        %964 = vmatprep.subr.mxu0 0.0
        %965 = vmatpush1.msra.mxu0 0.0
        %966 = vmatprep.subr.mxu0 0.0
        %967 = vmatpush1.msra.mxu0 0.0
        %968 = vmatprep.mubr.f32.mxu0 0.0
        %969 = vmatmul.mubr.f32.gmra.mrb[0].mxu0 %v902
        %v970 = vpop.f32.mrb[0].mxu0
        %v971 = vadd.f32 %v898, %v970
        %v972 = vpop.f32.mrb[0].mxu0
        %973 = vdwg.mxu0
        %v974 = vrot.slane %v810, 1
        %v975 = vsel %vm699, %v974, 0.0
        %v977 = vsel %vm546, %v975, 0
        %979 = vmatprep.subr.mxu0 0.0
        %980 = vmatpush1.msra.mxu0 %v819
        %981 = vmatprep.subr.mxu0 0.0
        %982 = vmatpush1.msra.mxu0 %v820
        %983 = vmatprep.subr.mxu0 0.0
        %984 = vmatpush1.msra.mxu0 %v821
        %985 = vmatprep.subr.mxu0 0.0
        %986 = vmatpush1.msra.mxu0 %v822
        %987 = vmatprep.subr.mxu0 0.0
        %988 = vmatpush1.msra.mxu0 0.0
        %989 = vmatprep.subr.mxu0 0.0
        %990 = vmatpush1.msra.mxu0 0.0
        %991 = vmatprep.subr.mxu0 0.0
        %992 = vmatpush1.msra.mxu0 0.0
        %993 = vmatprep.subr.mxu0 0.0
        %994 = vmatpush1.msra.mxu0 0.0
        %995 = vmatprep.subr.mxu0 0.0
        %996 = vmatpush1.msra.mxu0 0.0
        %997 = vmatprep.subr.mxu0 0.0
        %998 = vmatpush1.msra.mxu0 0.0
        %999 = vmatprep.subr.mxu0 0.0
        %1000 = vmatpush1.msra.mxu0 0.0
        %1001 = vmatprep.subr.mxu0 0.0
        %1002 = vmatpush1.msra.mxu0 0.0
        %1003 = vmatprep.subr.mxu0 0.0
        %1004 = vmatpush1.msra.mxu0 0.0
        %1005 = vmatprep.subr.mxu0 0.0
        %1006 = vmatpush1.msra.mxu0 0.0
        %1007 = vmatprep.subr.mxu0 0.0
        %1008 = vmatpush1.msra.mxu0 0.0
        %1009 = vmatprep.subr.mxu0 0.0
        %1010 = vmatpush1.msra.mxu0 0.0
        %1011 = vmatprep.subr.mxu0 0.0
        %1012 = vmatpush1.msra.mxu0 0.0
        %1013 = vmatprep.subr.mxu0 0.0
        %1014 = vmatpush1.msra.mxu0 0.0
        %1015 = vmatprep.subr.mxu0 0.0
        %1016 = vmatpush1.msra.mxu0 0.0
        %1017 = vmatprep.subr.mxu0 0.0
        %1018 = vmatpush1.msra.mxu0 0.0
        %1019 = vmatprep.subr.mxu0 0.0
        %1020 = vmatpush1.msra.mxu0 0.0
        %1021 = vmatprep.subr.mxu0 0.0
        %1022 = vmatpush1.msra.mxu0 0.0
        %1023 = vmatprep.subr.mxu0 0.0
        %1024 = vmatpush1.msra.mxu0 0.0
        %1025 = vmatprep.subr.mxu0 0.0
        %1026 = vmatpush1.msra.mxu0 0.0
        %1027 = vmatprep.subr.mxu0 0.0
        %1028 = vmatpush1.msra.mxu0 0.0
        %1029 = vmatprep.subr.mxu0 0.0
        %1030 = vmatpush1.msra.mxu0 0.0
        %1031 = vmatprep.subr.mxu0 0.0
        %1032 = vmatpush1.msra.mxu0 0.0
        %1033 = vmatprep.subr.mxu0 0.0
        %1034 = vmatpush1.msra.mxu0 0.0
        %1035 = vmatprep.subr.mxu0 0.0
        %1036 = vmatpush1.msra.mxu0 0.0
        %1037 = vmatprep.subr.mxu0 0.0
        %1038 = vmatpush1.msra.mxu0 0.0
        %1039 = vmatprep.subr.mxu0 0.0
        %1040 = vmatpush1.msra.mxu0 0.0
        %1041 = vmatprep.subr.mxu0 0.0
        %1042 = vmatpush1.msra.mxu0 0.0
        %1043 = vmatprep.mubr.f32.mxu0 0.0
        %1044 = vmatmul.mubr.f32.gmra.mrb[0].mxu0 %v977
        %v1045 = vpop.f32.mrb[0].mxu0
        %v1046 = vadd.f32 0.0, %v1045
        %v1047 = vpop.f32.mrb[0].mxu0
        %1048 = vdwg.mxu0
        %v1049 = vadd.f32 %v971, %v1046
        %v1051 = vlaneseq
        %v1052 = vshrl.u32 %v1051, 7
        %v1053 = vsub.s32 0, %v1052
        %v1054 = vrot.slane %v823, %v1053
        %v1056 = vadd.f32 %v1049, %v1054
        %v1057 = vsel %vm546, %v1056, 0.0
        %1058 = vadd.xlane.f32.xlu0 %v1057
        %v1059 = vpop.xlane.xlu0 %1058
        %v1060 = vmul.f32 %v1059, %v785
        %v1061 = vsub.f32 %v1056, %v1060
        %v1062 = vmul.f32 %v1061, %v1061
        %v1063 = vsel %vm546, %v1062, 0.0
        %1064 = vadd.xlane.f32.xlu0 %v1063
        %v1065 = vpop.xlane.xlu0 %1064
        %v1066 = vmul.f32 %v1065, %v785
        %v1067 = vadd.f32 %v1066, 1e-05
        %v1068 = vrsqrt.pop %v1067
        %v1069 = vmul.f32 %v1061, %v1068
        %v1071 = vlaneseq
        %v1072 = vshrl.u32 %v1071, 7
        %v1073 = vsub.s32 0, %v1072
        %v1074 = vrot.slane %v824, %v1073
        %v1076 = vmul.f32 %v1069, %v1074
        %v1078 = vlaneseq
        %v1079 = vshrl.u32 %v1078, 7
        %v1080 = vsub.s32 0, %v1079
        %v1081 = vrot.slane %v825, %v1080
        %v1083 = vadd.f32 %v1076, %v1081
        %v1084 = vmax.f32 %v1083, 0.0
        %v1085 = vld [vmem:[#allocation18] sm:$0x1]
        %v1087 = vlaneseq
        %v1088 = vshrl.u32 %v1087, 7
        %v1089 = vsub.s32 0, %v1088
        %v1090 = vrot.slane %v1085, %v1089
        %v1092 = vmul.f32 %v1084, %v1090
        %v1093 = vsel %vm546, %v1092, 0.0
        %1094 = vadd.xlane.f32.xlu0 %v1093
        %v1095 = vpop.xlane.xlu0 %1094
        %v1096 = vld [vmem:[#allocation2] sm:$0x1]
        %s1097 = vtos %v1096
        %v1098 = vstv %s1097
        %v1099 = vadd.f32 %v1095, %v1098
        %v1100 = vmax.f32 %v1099, 0.0
        %v1102 = vlaneseq
        %v1103 = vand.u32 %v1102, 127
        %v1104 = vlaneseq
        %v1105 = vshrl.u32 %v1104, 7
        %v1106 = vsub.s32 %v1103, %v1105
        %v1107 = vrot.slane %v1100, %v1106
        %vm1109 = vcmask 57344
        %1110 = vst.msk [vmem:[%s519] sm:$0x1] %vm1109, %v1107
        %s1111 = sand.u32 %s279, 1
        %s1112 = scalar_lea.sflag [#allocation5], %s1111
        %s1113 = sand.u32 %s279, 1
        %s1114 = scalar_lea.vmem [#allocation20], %s1113
        // Predicated region
        $region105: #{tpu_custom_call.1} parent=63 // pred_check
          %p1115 = pneg %p289
        $region106: #{tpu_custom_call.1} parent=63 // pred_check_branch
          %1117 = sbr.rel (%p1115) target = $region108
        $region107: #{tpu_custom_call.1} parent=63 // pred_region
          %s1119 = ssub.s32 16, 16
          %1120 = vsyncadd %s1112, %s1119
          %s1121 = smul.addr %s35, 16
          %s1122 = scalar_lea.hbm %s11, %s1121
          %s1124 = sshll.u32 %s1114, 4
          %s1125 = int_to_ptr.vmem [resolvable:$true] %s1124
          %1127 = dma.vmem_to_hbm [thread:$0]  %s1125, 16, %s1122, %s1112
        $region108: #{tpu_custom_call.1} parent=63 // pred_fallthru
          _
      $region64: #{tpu_custom_call.1} parent=5 // pred_fallthru
        _
      %p1128 = scmp.le.s32.totalorder 2, %s30
      // Predicated region
      $region109: #{tpu_custom_call.1} parent=5 // pred_check
        %p1129 = pneg %p1128
      $region110: #{tpu_custom_call.1} parent=5 // pred_check_branch
        %1131 = sbr.rel (%p1129) target = $region112
      $region111: #{tpu_custom_call.1} parent=5 // pred_region
        %s1132 = ssub.s32 %s30, 2
        // Predicated region
        $region113: #{tpu_custom_call.1} parent=111 // pred_check
          %p1133 = pneg %p295
        $region114: #{tpu_custom_call.1} parent=111 // pred_check_branch
          %1135 = sbr.rel (%p1133) target = $region116
        $region115: #{tpu_custom_call.1} parent=111 // pred_region
          %s1136 = sand.u32 %s280, 1
          %s1137 = scalar_lea.sflag [#allocation5], %s1136
          %s1138 = sand.u32 %s280, 1
          %s1139 = scalar_lea.vmem [#allocation20], %s1138
          %1140 = dma.done %s1137, 16
        $region116: #{tpu_custom_call.1} parent=111 // pred_fallthru
          _
      $region112: #{tpu_custom_call.1} parent=5 // pred_fallthru
        _
    $region6: #{tpu_custom_call.1} parent=1 // loop_footer
      %s34 = sadd.s32 1, %s30
    $region7: #{tpu_custom_call.1} parent=1 // loop_footer_branch
      %29 = sbr.rel target = $region3
    $region8: #{tpu_custom_call.1} parent=1 // loop_exit
      _
    %1141 = vsyncpa [#allocation4], 1
    %s1142 = scalar_lea.sflag [#allocation4], 1
    %1143 = vsyncpa %s1142, 1
    %1144 = vsyncpa [#allocation7], 1
    %1145 = vsyncpa [#allocation10], 1
    %1146 = vsyncpa [#allocation13], 1
    %1147 = vsyncpa [#allocation16], 1
    %1148 = vsyncpa [#allocation19], 1
    %1149 = vsyncpa [#allocation5], 1
    %s1150 = scalar_lea.sflag [#allocation5], 1
    %1151 = vsyncpa %s1150, 1

</llo_original>
